<compile_context>
chip_gen: v7x
topology: tpu7x:2x2x1
jax: 0.10.0
libtpu: 0.0.40
codegen_flags: <defaults>
</compile_context>

<pallas_src>
import functools
from math import sqrt

import jax
import jax.numpy as jnp
from jax.experimental import pallas as pl
from jax.experimental.pallas import tpu as pltpu


def _round_up(v, m):
    return ((v + m - 1) // m) * m


def _vmem_bytes_estimate(C, H, W, c_block, in_dtype, out_dtype, stage_dtype):
    """Rough per-step VMEM footprint: double-buffered pipeline bufs + scratch."""
    HW = H * W
    ib = jnp.dtype(in_dtype).itemsize
    ob = jnp.dtype(out_dtype).itemsize
    sb = jnp.dtype(stage_dtype).itemsize
    x_blk = _round_up(C, 8) * _round_up(HW, 128) * ib            # (1, C, H*W) flat input
    w_blk = _round_up(c_block, 8) * _round_up(C, 128) * ib        # (c_block, C) weight tile
    o_blk = c_block * _round_up(H, 8) * _round_up(W, 128) * ob    # (1, c_block, H, W) output
    scr = 3 * c_block * _round_up(H, 8) * _round_up(W, 128) * sb  # q/k/v staging
    return 2 * (2 * x_blk + 3 * w_blk + o_blk) + scr


def _pick_c_block(C, H, W, in_dtype, out_dtype, stage_dtype, budget_bytes):
    # Valid tiles must divide C and satisfy the (8,128) rule on the
    # (c_block, C) weight block: c_block == C, or a multiple of 8.
    cands = [d for d in range(C, 0, -1)
             if C % d == 0 and (d == C or d % 8 == 0)]
    for d in cands:
        if _vmem_bytes_estimate(C, H, W, d, in_dtype, out_dtype,
                                stage_dtype) <= budget_bytes:
            return d
    return cands[-1]   # smallest valid tile; x/x_s blocks dominate beyond this


def _cross_attention_kernel(wq_ref, wk_ref, wv_ref, x_ref, xs_ref, o_ref,
                            q_s, k_s, v_s, *, H, W):
    """One (batch, channel-tile) grid step.

    wq_ref/wk_ref/wv_ref : (Ct, C)        weight tiles (1/sqrt(C) folded in wq)
    x_ref / xs_ref       : (1, C, H*W)    lane-dense input slabs for batch b
    o_ref                : (1, Ct, H, W)  output channel tile
    q_s / k_s / v_s      : (Ct, H, W)     staged projections (one copy each)
    """
    x2 = x_ref[0]        # (C, H*W)
    xs2 = xs_ref[0]      # (C, H*W)

    # --- projections: ONE lane-dense MXU matmul each, f32 accumulation ------
    q_flat = jnp.dot(wq_ref[...], x2,
                     preferred_element_type=jnp.float32).astype(q_s.dtype)
    k_flat = jnp.dot(wk_ref[...], xs2,
                     preferred_element_type=jnp.float32).astype(k_s.dtype)
    v_flat = jnp.dot(wv_ref[...], xs2,
                     preferred_element_type=jnp.float32).astype(v_s.dtype)

    # --- re-tile (Ct, H*W) -> (Ct, H, W): static lane slices + sublane stores
    # (one staged copy each; replaces the old per-row matmul + store loop).
    for h in range(H):
        sl = slice(h * W, (h + 1) * W)
        q_s[:, h, :] = q_flat[:, sl]
        k_s[:, h, :] = k_flat[:, sl]
        v_s[:, h, :] = v_flat[:, sl]

    q = q_s[...]
    k = k_s[...]
    v = v_s[...]

    # --- per-channel scaled dot-product attention over the H rows -----------
    logits = jnp.einsum('chw,cgw->chg', q, k,
                        preferred_element_type=jnp.float32)      # (Ct, H, H)
    m = jnp.max(logits, axis=-1, keepdims=True)
    p = jnp.exp(logits - m)
    denom = jnp.sum(p, axis=-1, keepdims=True)
    inv = pl.reciprocal(denom, approx=False)   # approx=True when tolerance allows
    if H <= W:                                 # normalise the smaller tensor
        p = p * inv
        out = jnp.einsum('chg,cgw->chw', p.astype(v.dtype), v,
                         preferred_element_type=jnp.float32)     # (Ct, H, W)
    else:
        out = jnp.einsum('chg,cgw->chw', p.astype(v.dtype), v,
                         preferred_element_type=jnp.float32) * inv

    o_ref[0] = out.astype(o_ref.dtype)


def cross_attention(x, x_s, wq, wkv, *, c_block=None, compute_dtype=None,
                    vmem_budget_bytes=40 * 2**20):
    """x, x_s: (N, C, H, W).  wq: (C, C).  wkv: (2C, C) (k rows first, then v).

    compute_dtype=jnp.bfloat16 feeds bf16 operands to the MXU and stages q/k/v
    in bf16 (v6e/v7x fast path, looser accuracy); default keeps x.dtype.
    """
    N, C, H, W = x.shape
    assert x_s.shape == x.shape
    assert wq.shape == (C, C) and wkv.shape == (2 * C, C)

    out_dtype = x.dtype
    cdt = jnp.dtype(compute_dtype) if compute_dtype is not None else jnp.dtype(x.dtype)
    stage_dtype = cdt if cdt == jnp.dtype(jnp.bfloat16) else jnp.dtype(jnp.float32)

    # Fold the 1/sqrt(C) query scale into Wq once (PyTorch: q / C**0.5).
    scale = 1.0 / sqrt(C)
    wq_c = (wq.astype(jnp.float32) * scale).astype(cdt)
    wk_c = wkv[:C].astype(cdt)
    wv_c = wkv[C:].astype(cdt)

    # Lane-dense flat views of the inputs (free, metadata-only reshapes).
    xf = x.reshape(N, C, H * W).astype(cdt)
    xsf = x_s.reshape(N, C, H * W).astype(cdt)

    if c_block is None:
        c_block = _pick_c_block(C, H, W, cdt, out_dtype, stage_dtype,
                                vmem_budget_bytes)
    assert C % c_block == 0 and (c_block == C or c_block % 8 == 0)
    n_ct = C // c_block

    est = _vmem_bytes_estimate(C, H, W, c_block, cdt, out_dtype, stage_dtype)
    vmem_limit = int(min(64 * 2**20, max(32 * 2**20, est + 8 * 2**20)))

    kernel = functools.partial(_cross_attention_kernel, H=H, W=W)

    w_spec = pl.BlockSpec((c_block, C), lambda b, ct: (ct, 0))
    in_spec = pl.BlockSpec((1, C, H * W), lambda b, ct: (b, 0, 0))
    out_spec = pl.BlockSpec((1, c_block, H, W), lambda b, ct: (b, ct, 0, 0))

    return pl.pallas_call(
        kernel,
        out_shape=jax.ShapeDtypeStruct((N, C, H, W), out_dtype),
        grid=(N, n_ct),
        in_specs=[w_spec, w_spec, w_spec, in_spec, in_spec],
        out_specs=out_spec,
        scratch_shapes=[
            pltpu.VMEM((c_block, H, W), stage_dtype),   # q
            pltpu.VMEM((c_block, H, W), stage_dtype),   # k
            pltpu.VMEM((c_block, H, W), stage_dtype),   # v
        ],
        compiler_params=pltpu.CompilerParams(
            dimension_semantics=("parallel", "arbitrary"),
            vmem_limit_bytes=vmem_limit),
    )(wq_c, wk_c, wv_c, xf, xsf)


def cross_attention_reference(x, x_s, wq, wkv):
    """Pure-JAX reference, mirrors the PyTorch forward exactly."""
    N, C, H, W = x.shape
    temperature = float(C) ** 0.5
    hi = jax.lax.Precision.HIGHEST
    q = jnp.einsum('bchw,oc->bohw', x, wq, precision=hi)
    kv = jnp.einsum('bchw,oc->bohw', x_s, wkv, precision=hi)
    k, v = kv[:, :C], kv[:, C:]
    attn = jnp.einsum('bchw,bcgw->bchg', q / temperature, k, precision=hi)
    attn = jax.nn.softmax(attn, axis=-1)
    return jnp.einsum('bchg,bcgw->bchw', attn, v, precision=hi)


if __name__ == "__main__":
    key = jax.random.PRNGKey(0)
    k_x, k_xs, k_q, k_kv = jax.random.split(key, 4)

    N, C, H, W = 2, 4, 16, 16            # num_features = C = 4
    x = jax.random.normal(k_x, (N, C, H, W), dtype=jnp.float32)
    x_s = jax.random.normal(k_xs, (N, C, H, W), dtype=jnp.float32)

    # nn.Linear(C, C, bias=False) / nn.Linear(C, 2C, bias=False) style init.
    bound = 1.0 / sqrt(C)
    wq = jax.random.uniform(k_q, (C, C), jnp.float32, -bound, bound)
    wkv = jax.random.uniform(k_kv, (2 * C, C), jnp.float32, -bound, bound)

    out = jax.block_until_ready(cross_attention(x, x_s, wq, wkv))
    ref = cross_attention_reference(x, x_s, wq, wkv)

    assert out.shape == (N, C, H, W)
    err = float(jnp.max(jnp.abs(out - ref)))
    assert jnp.allclose(out, ref, rtol=1e-4, atol=1e-4), \
        f"mismatch vs reference, max abs err={err}"

    print("KERNEL_OK")
</pallas_src>

<mosaic_0001>
module attributes {stable_mosaic.version = 11 : i64} {
  func.func @_cross_attention_kernel(%arg0: i32, %arg1: i32, %arg2: memref<4x4xf32, #tpu.memory_space<vmem>>, %arg3: memref<4x4xf32, #tpu.memory_space<vmem>>, %arg4: memref<4x4xf32, #tpu.memory_space<vmem>>, %arg5: memref<1x4x256xf32, #tpu.memory_space<vmem>>, %arg6: memref<1x4x256xf32, #tpu.memory_space<vmem>>, %arg7: memref<1x4x16x16xf32, #tpu.memory_space<vmem>>, %arg8: memref<4x16x16xf32, #tpu.memory_space<vmem>>, %arg9: memref<4x16x16xf32, #tpu.memory_space<vmem>>, %arg10: memref<4x16x16xf32, #tpu.memory_space<vmem>>) attributes {dimension_semantics = [#tpu.dimension_semantics<parallel>, #tpu.dimension_semantics<arbitrary>], iteration_bounds = array<i64: 2, 1>, scalar_prefetch = 0 : i64, scratch_operands = 3 : i64, tpu.core_type = #tpu.core_type<tc>, window_params = [{transform_indices = @transform_0, window_bounds = array<i64: 4, 4>}, {transform_indices = @transform_1, window_bounds = array<i64: 4, 4>}, {transform_indices = @transform_2, window_bounds = array<i64: 4, 4>}, {transform_indices = @transform_3, window_bounds = array<i64: 1, 4, 256>}, {transform_indices = @transform_4, window_bounds = array<i64: 1, 4, 256>}, {transform_indices = @transform_5, window_bounds = array<i64: 1, 4, 16, 16>}]} {
    %c0 = arith.constant 0 : index
    %c0_0 = arith.constant 0 : index
    %c0_1 = arith.constant 0 : index
    %0 = vector.load %arg5[%c0, %c0_0, %c0_1] : memref<1x4x256xf32, #tpu.memory_space<vmem>>, vector<1x4x256xf32>
    %1 = vector.shape_cast %0 : vector<1x4x256xf32> to vector<4x256xf32>
    %c0_2 = arith.constant 0 : index
    %c0_3 = arith.constant 0 : index
    %c0_4 = arith.constant 0 : index
    %2 = vector.load %arg6[%c0_2, %c0_3, %c0_4] : memref<1x4x256xf32, #tpu.memory_space<vmem>>, vector<1x4x256xf32>
    %3 = vector.shape_cast %2 : vector<1x4x256xf32> to vector<4x256xf32>
    %c0_5 = arith.constant 0 : index
    %c0_6 = arith.constant 0 : index
    %4 = vector.load %arg2[%c0_5, %c0_6] : memref<4x4xf32, #tpu.memory_space<vmem>>, vector<4x4xf32>
    %cst = arith.constant dense<0.000000e+00> : vector<4x256xf32>
    %5 = tpu.matmul %4, %1, %cst {dimension_numbers = #tpu.dot_dimension_numbers<[1], [0], [0], [1], [0, 0, 1, 1], [], []>} : vector<4x4xf32>, vector<4x256xf32>, vector<4x256xf32> -> vector<4x256xf32>
    %c0_7 = arith.constant 0 : index
    %c0_8 = arith.constant 0 : index
    %6 = vector.load %arg3[%c0_7, %c0_8] : memref<4x4xf32, #tpu.memory_space<vmem>>, vector<4x4xf32>
    %cst_9 = arith.constant dense<0.000000e+00> : vector<4x256xf32>
    %7 = tpu.matmul %6, %3, %cst_9 {dimension_numbers = #tpu.dot_dimension_numbers<[1], [0], [0], [1], [0, 0, 1, 1], [], []>} : vector<4x4xf32>, vector<4x256xf32>, vector<4x256xf32> -> vector<4x256xf32>
    %c0_10 = arith.constant 0 : index
    %c0_11 = arith.constant 0 : index
    %8 = vector.load %arg4[%c0_10, %c0_11] : memref<4x4xf32, #tpu.memory_space<vmem>>, vector<4x4xf32>
    %cst_12 = arith.constant dense<0.000000e+00> : vector<4x256xf32>
    %9 = tpu.matmul %8, %3, %cst_12 {dimension_numbers = #tpu.dot_dimension_numbers<[1], [0], [0], [1], [0, 0, 1, 1], [], []>} : vector<4x4xf32>, vector<4x256xf32>, vector<4x256xf32> -> vector<4x256xf32>
    %10 = vector.extract_strided_slice %5 {offsets = [0, 0], sizes = [4, 16], strides = [1, 1]} : vector<4x256xf32> to vector<4x16xf32>
    %c0_13 = arith.constant 0 : index
    %c0_14 = arith.constant 0 : index
    %c0_15 = arith.constant 0 : index
    %11 = vector.load %arg8[%c0_13, %c0_14, %c0_15] : memref<4x16x16xf32, #tpu.memory_space<vmem>>, vector<4x1x16xf32>
    %12 = vector.shape_cast %11 : vector<4x1x16xf32> to vector<4x16xf32>
    %13 = vector.shape_cast %10 : vector<4x16xf32> to vector<4x1x16xf32>
    tpu.vector_store %arg8[%c0_13, %c0_14, %c0_15], %13 {strides = array<i32>} : memref<4x16x16xf32, #tpu.memory_space<vmem>>, vector<4x1x16xf32>,
    %14 = vector.extract_strided_slice %7 {offsets = [0, 0], sizes = [4, 16], strides = [1, 1]} : vector<4x256xf32> to vector<4x16xf32>
    %c0_16 = arith.constant 0 : index
    %c0_17 = arith.constant 0 : index
    %c0_18 = arith.constant 0 : index
    %15 = vector.load %arg9[%c0_16, %c0_17, %c0_18] : memref<4x16x16xf32, #tpu.memory_space<vmem>>, vector<4x1x16xf32>
    %16 = vector.shape_cast %15 : vector<4x1x16xf32> to vector<4x16xf32>
    %17 = vector.shape_cast %14 : vector<4x16xf32> to vector<4x1x16xf32>
    tpu.vector_store %arg9[%c0_16, %c0_17, %c0_18], %17 {strides = array<i32>} : memref<4x16x16xf32, #tpu.memory_space<vmem>>, vector<4x1x16xf32>,
    %18 = vector.extract_strided_slice %9 {offsets = [0, 0], sizes = [4, 16], strides = [1, 1]} : vector<4x256xf32> to vector<4x16xf32>
    %c0_19 = arith.constant 0 : index
    %c0_20 = arith.constant 0 : index
    %c0_21 = arith.constant 0 : index
    %19 = vector.load %arg10[%c0_19, %c0_20, %c0_21] : memref<4x16x16xf32, #tpu.memory_space<vmem>>, vector<4x1x16xf32>
    %20 = vector.shape_cast %19 : vector<4x1x16xf32> to vector<4x16xf32>
    %21 = vector.shape_cast %18 : vector<4x16xf32> to vector<4x1x16xf32>
    tpu.vector_store %arg10[%c0_19, %c0_20, %c0_21], %21 {strides = array<i32>} : memref<4x16x16xf32, #tpu.memory_space<vmem>>, vector<4x1x16xf32>,
    %22 = vector.extract_strided_slice %5 {offsets = [0, 16], sizes = [4, 16], strides = [1, 1]} : vector<4x256xf32> to vector<4x16xf32>
    %c0_22 = arith.constant 0 : index
    %c1 = arith.constant 1 : index
    %c0_23 = arith.constant 0 : index
    %23 = vector.load %arg8[%c0_22, %c1, %c0_23] : memref<4x16x16xf32, #tpu.memory_space<vmem>>, vector<4x1x16xf32>
    %24 = vector.shape_cast %23 : vector<4x1x16xf32> to vector<4x16xf32>
    %25 = vector.shape_cast %22 : vector<4x16xf32> to vector<4x1x16xf32>
    tpu.vector_store %arg8[%c0_22, %c1, %c0_23], %25 {strides = array<i32>} : memref<4x16x16xf32, #tpu.memory_space<vmem>>, vector<4x1x16xf32>,
    %26 = vector.extract_strided_slice %7 {offsets = [0, 16], sizes = [4, 16], strides = [1, 1]} : vector<4x256xf32> to vector<4x16xf32>
    %c0_24 = arith.constant 0 : index
    %c1_25 = arith.constant 1 : index
    %c0_26 = arith.constant 0 : index
    %27 = vector.load %arg9[%c0_24, %c1_25, %c0_26] : memref<4x16x16xf32, #tpu.memory_space<vmem>>, vector<4x1x16xf32>
    %28 = vector.shape_cast %27 : vector<4x1x16xf32> to vector<4x16xf32>
    %29 = vector.shape_cast %26 : vector<4x16xf32> to vector<4x1x16xf32>
    tpu.vector_store %arg9[%c0_24, %c1_25, %c0_26], %29 {strides = array<i32>} : memref<4x16x16xf32, #tpu.memory_space<vmem>>, vector<4x1x16xf32>,
    %30 = vector.extract_strided_slice %9 {offsets = [0, 16], sizes = [4, 16], strides = [1, 1]} : vector<4x256xf32> to vector<4x16xf32>
    %c0_27 = arith.constant 0 : index
    %c1_28 = arith.constant 1 : index
    %c0_29 = arith.constant 0 : index
    %31 = vector.load %arg10[%c0_27, %c1_28, %c0_29] : memref<4x16x16xf32, #tpu.memory_space<vmem>>, vector<4x1x16xf32>
    %32 = vector.shape_cast %31 : vector<4x1x16xf32> to vector<4x16xf32>
    %33 = vector.shape_cast %30 : vector<4x16xf32> to vector<4x1x16xf32>
    tpu.vector_store %arg10[%c0_27, %c1_28, %c0_29], %33 {strides = array<i32>} : memref<4x16x16xf32, #tpu.memory_space<vmem>>, vector<4x1x16xf32>,
    %34 = vector.extract_strided_slice %5 {offsets = [0, 32], sizes = [4, 16], strides = [1, 1]} : vector<4x256xf32> to vector<4x16xf32>
    %c0_30 = arith.constant 0 : index
    %c2 = arith.constant 2 : index
    %c0_31 = arith.constant 0 : index
    %35 = vector.load %arg8[%c0_30, %c2, %c0_31] : memref<4x16x16xf32, #tpu.memory_space<vmem>>, vector<4x1x16xf32>
    %36 = vector.shape_cast %35 : vector<4x1x16xf32> to vector<4x16xf32>
    %37 = vector.shape_cast %34 : vector<4x16xf32> to vector<4x1x16xf32>
    tpu.vector_store %arg8[%c0_30, %c2, %c0_31], %37 {strides = array<i32>} : memref<4x16x16xf32, #tpu.memory_space<vmem>>, vector<4x1x16xf32>,
    %38 = vector.extract_strided_slice %7 {offsets = [0, 32], sizes = [4, 16], strides = [1, 1]} : vector<4x256xf32> to vector<4x16xf32>
    %c0_32 = arith.constant 0 : index
    %c2_33 = arith.constant 2 : index
    %c0_34 = arith.constant 0 : index
    %39 = vector.load %arg9[%c0_32, %c2_33, %c0_34] : memref<4x16x16xf32, #tpu.memory_space<vmem>>, vector<4x1x16xf32>
    %40 = vector.shape_cast %39 : vector<4x1x16xf32> to vector<4x16xf32>
    %41 = vector.shape_cast %38 : vector<4x16xf32> to vector<4x1x16xf32>
    tpu.vector_store %arg9[%c0_32, %c2_33, %c0_34], %41 {strides = array<i32>} : memref<4x16x16xf32, #tpu.memory_space<vmem>>, vector<4x1x16xf32>,
    %42 = vector.extract_strided_slice %9 {offsets = [0, 32], sizes = [4, 16], strides = [1, 1]} : vector<4x256xf32> to vector<4x16xf32>
    %c0_35 = arith.constant 0 : index
    %c2_36 = arith.constant 2 : index
    %c0_37 = arith.constant 0 : index
    %43 = vector.load %arg10[%c0_35, %c2_36, %c0_37] : memref<4x16x16xf32, #tpu.memory_space<vmem>>, vector<4x1x16xf32>
    %44 = vector.shape_cast %43 : vector<4x1x16xf32> to vector<4x16xf32>
    %45 = vector.shape_cast %42 : vector<4x16xf32> to vector<4x1x16xf32>
    tpu.vector_store %arg10[%c0_35, %c2_36, %c0_37], %45 {strides = array<i32>} : memref<4x16x16xf32, #tpu.memory_space<vmem>>, vector<4x1x16xf32>,
    %46 = vector.extract_strided_slice %5 {offsets = [0, 48], sizes = [4, 16], strides = [1, 1]} : vector<4x256xf32> to vector<4x16xf32>
    %c0_38 = arith.constant 0 : index
    %c3 = arith.constant 3 : index
    %c0_39 = arith.constant 0 : index
    %47 = vector.load %arg8[%c0_38, %c3, %c0_39] : memref<4x16x16xf32, #tpu.memory_space<vmem>>, vector<4x1x16xf32>
    %48 = vector.shape_cast %47 : vector<4x1x16xf32> to vector<4x16xf32>
    %49 = vector.shape_cast %46 : vector<4x16xf32> to vector<4x1x16xf32>
    tpu.vector_store %arg8[%c0_38, %c3, %c0_39], %49 {strides = array<i32>} : memref<4x16x16xf32, #tpu.memory_space<vmem>>, vector<4x1x16xf32>,
    %50 = vector.extract_strided_slice %7 {offsets = [0, 48], sizes = [4, 16], strides = [1, 1]} : vector<4x256xf32> to vector<4x16xf32>
    %c0_40 = arith.constant 0 : index
    %c3_41 = arith.constant 3 : index
    %c0_42 = arith.constant 0 : index
    %51 = vector.load %arg9[%c0_40, %c3_41, %c0_42] : memref<4x16x16xf32, #tpu.memory_space<vmem>>, vector<4x1x16xf32>
    %52 = vector.shape_cast %51 : vector<4x1x16xf32> to vector<4x16xf32>
    %53 = vector.shape_cast %50 : vector<4x16xf32> to vector<4x1x16xf32>
    tpu.vector_store %arg9[%c0_40, %c3_41, %c0_42], %53 {strides = array<i32>} : memref<4x16x16xf32, #tpu.memory_space<vmem>>, vector<4x1x16xf32>,
    %54 = vector.extract_strided_slice %9 {offsets = [0, 48], sizes = [4, 16], strides = [1, 1]} : vector<4x256xf32> to vector<4x16xf32>
    %c0_43 = arith.constant 0 : index
    %c3_44 = arith.constant 3 : index
    %c0_45 = arith.constant 0 : index
    %55 = vector.load %arg10[%c0_43, %c3_44, %c0_45] : memref<4x16x16xf32, #tpu.memory_space<vmem>>, vector<4x1x16xf32>
    %56 = vector.shape_cast %55 : vector<4x1x16xf32> to vector<4x16xf32>
    %57 = vector.shape_cast %54 : vector<4x16xf32> to vector<4x1x16xf32>
    tpu.vector_store %arg10[%c0_43, %c3_44, %c0_45], %57 {strides = array<i32>} : memref<4x16x16xf32, #tpu.memory_space<vmem>>, vector<4x1x16xf32>,
    %58 = vector.extract_strided_slice %5 {offsets = [0, 64], sizes = [4, 16], strides = [1, 1]} : vector<4x256xf32> to vector<4x16xf32>
    %c0_46 = arith.constant 0 : index
    %c4 = arith.constant 4 : index
    %c0_47 = arith.constant 0 : index
    %59 = vector.load %arg8[%c0_46, %c4, %c0_47] : memref<4x16x16xf32, #tpu.memory_space<vmem>>, vector<4x1x16xf32>
    %60 = vector.shape_cast %59 : vector<4x1x16xf32> to vector<4x16xf32>
    %61 = vector.shape_cast %58 : vector<4x16xf32> to vector<4x1x16xf32>
    tpu.vector_store %arg8[%c0_46, %c4, %c0_47], %61 {strides = array<i32>} : memref<4x16x16xf32, #tpu.memory_space<vmem>>, vector<4x1x16xf32>,
    %62 = vector.extract_strided_slice %7 {offsets = [0, 64], sizes = [4, 16], strides = [1, 1]} : vector<4x256xf32> to vector<4x16xf32>
    %c0_48 = arith.constant 0 : index
    %c4_49 = arith.constant 4 : index
    %c0_50 = arith.constant 0 : index
    %63 = vector.load %arg9[%c0_48, %c4_49, %c0_50] : memref<4x16x16xf32, #tpu.memory_space<vmem>>, vector<4x1x16xf32>
    %64 = vector.shape_cast %63 : vector<4x1x16xf32> to vector<4x16xf32>
    %65 = vector.shape_cast %62 : vector<4x16xf32> to vector<4x1x16xf32>
    tpu.vector_store %arg9[%c0_48, %c4_49, %c0_50], %65 {strides = array<i32>} : memref<4x16x16xf32, #tpu.memory_space<vmem>>, vector<4x1x16xf32>,
    %66 = vector.extract_strided_slice %9 {offsets = [0, 64], sizes = [4, 16], strides = [1, 1]} : vector<4x256xf32> to vector<4x16xf32>
    %c0_51 = arith.constant 0 : index
    %c4_52 = arith.constant 4 : index
    %c0_53 = arith.constant 0 : index
    %67 = vector.load %arg10[%c0_51, %c4_52, %c0_53] : memref<4x16x16xf32, #tpu.memory_space<vmem>>, vector<4x1x16xf32>
    %68 = vector.shape_cast %67 : vector<4x1x16xf32> to vector<4x16xf32>
    %69 = vector.shape_cast %66 : vector<4x16xf32> to vector<4x1x16xf32>
    tpu.vector_store %arg10[%c0_51, %c4_52, %c0_53], %69 {strides = array<i32>} : memref<4x16x16xf32, #tpu.memory_space<vmem>>, vector<4x1x16xf32>,
    %70 = vector.extract_strided_slice %5 {offsets = [0, 80], sizes = [4, 16], strides = [1, 1]} : vector<4x256xf32> to vector<4x16xf32>
    %c0_54 = arith.constant 0 : index
    %c5 = arith.constant 5 : index
    %c0_55 = arith.constant 0 : index
    %71 = vector.load %arg8[%c0_54, %c5, %c0_55] : memref<4x16x16xf32, #tpu.memory_space<vmem>>, vector<4x1x16xf32>
    %72 = vector.shape_cast %71 : vector<4x1x16xf32> to vector<4x16xf32>
    %73 = vector.shape_cast %70 : vector<4x16xf32> to vector<4x1x16xf32>
    tpu.vector_store %arg8[%c0_54, %c5, %c0_55], %73 {strides = array<i32>} : memref<4x16x16xf32, #tpu.memory_space<vmem>>, vector<4x1x16xf32>,
    %74 = vector.extract_strided_slice %7 {offsets = [0, 80], sizes = [4, 16], strides = [1, 1]} : vector<4x256xf32> to vector<4x16xf32>
    %c0_56 = arith.constant 0 : index
    %c5_57 = arith.constant 5 : index
    %c0_58 = arith.constant 0 : index
    %75 = vector.load %arg9[%c0_56, %c5_57, %c0_58] : memref<4x16x16xf32, #tpu.memory_space<vmem>>, vector<4x1x16xf32>
    %76 = vector.shape_cast %75 : vector<4x1x16xf32> to vector<4x16xf32>
    %77 = vector.shape_cast %74 : vector<4x16xf32> to vector<4x1x16xf32>
    tpu.vector_store %arg9[%c0_56, %c5_57, %c0_58], %77 {strides = array<i32>} : memref<4x16x16xf32, #tpu.memory_space<vmem>>, vector<4x1x16xf32>,
    %78 = vector.extract_strided_slice %9 {offsets = [0, 80], sizes = [4, 16], strides = [1, 1]} : vector<4x256xf32> to vector<4x16xf32>
    %c0_59 = arith.constant 0 : index
    %c5_60 = arith.constant 5 : index
    %c0_61 = arith.constant 0 : index
    %79 = vector.load %arg10[%c0_59, %c5_60, %c0_61] : memref<4x16x16xf32, #tpu.memory_space<vmem>>, vector<4x1x16xf32>
    %80 = vector.shape_cast %79 : vector<4x1x16xf32> to vector<4x16xf32>
    %81 = vector.shape_cast %78 : vector<4x16xf32> to vector<4x1x16xf32>
    tpu.vector_store %arg10[%c0_59, %c5_60, %c0_61], %81 {strides = array<i32>} : memref<4x16x16xf32, #tpu.memory_space<vmem>>, vector<4x1x16xf32>,
    %82 = vector.extract_strided_slice %5 {offsets = [0, 96], sizes = [4, 16], strides = [1, 1]} : vector<4x256xf32> to vector<4x16xf32>
    %c0_62 = arith.constant 0 : index
    %c6 = arith.constant 6 : index
    %c0_63 = arith.constant 0 : index
    %83 = vector.load %arg8[%c0_62, %c6, %c0_63] : memref<4x16x16xf32, #tpu.memory_space<vmem>>, vector<4x1x16xf32>
    %84 = vector.shape_cast %83 : vector<4x1x16xf32> to vector<4x16xf32>
    %85 = vector.shape_cast %82 : vector<4x16xf32> to vector<4x1x16xf32>
    tpu.vector_store %arg8[%c0_62, %c6, %c0_63], %85 {strides = array<i32>} : memref<4x16x16xf32, #tpu.memory_space<vmem>>, vector<4x1x16xf32>,
    %86 = vector.extract_strided_slice %7 {offsets = [0, 96], sizes = [4, 16], strides = [1, 1]} : vector<4x256xf32> to vector<4x16xf32>
    %c0_64 = arith.constant 0 : index
    %c6_65 = arith.constant 6 : index
    %c0_66 = arith.constant 0 : index
    %87 = vector.load %arg9[%c0_64, %c6_65, %c0_66] : memref<4x16x16xf32, #tpu.memory_space<vmem>>, vector<4x1x16xf32>
    %88 = vector.shape_cast %87 : vector<4x1x16xf32> to vector<4x16xf32>
    %89 = vector.shape_cast %86 : vector<4x16xf32> to vector<4x1x16xf32>
    tpu.vector_store %arg9[%c0_64, %c6_65, %c0_66], %89 {strides = array<i32>} : memref<4x16x16xf32, #tpu.memory_space<vmem>>, vector<4x1x16xf32>,
    %90 = vector.extract_strided_slice %9 {offsets = [0, 96], sizes = [4, 16], strides = [1, 1]} : vector<4x256xf32> to vector<4x16xf32>
    %c0_67 = arith.constant 0 : index
    %c6_68 = arith.constant 6 : index
    %c0_69 = arith.constant 0 : index
    %91 = vector.load %arg10[%c0_67, %c6_68, %c0_69] : memref<4x16x16xf32, #tpu.memory_space<vmem>>, vector<4x1x16xf32>
    %92 = vector.shape_cast %91 : vector<4x1x16xf32> to vector<4x16xf32>
    %93 = vector.shape_cast %90 : vector<4x16xf32> to vector<4x1x16xf32>
    tpu.vector_store %arg10[%c0_67, %c6_68, %c0_69], %93 {strides = array<i32>} : memref<4x16x16xf32, #tpu.memory_space<vmem>>, vector<4x1x16xf32>,
    %94 = vector.extract_strided_slice %5 {offsets = [0, 112], sizes = [4, 16], strides = [1, 1]} : vector<4x256xf32> to vector<4x16xf32>
    %c0_70 = arith.constant 0 : index
    %c7 = arith.constant 7 : index
    %c0_71 = arith.constant 0 : index
    %95 = vector.load %arg8[%c0_70, %c7, %c0_71] : memref<4x16x16xf32, #tpu.memory_space<vmem>>, vector<4x1x16xf32>
    %96 = vector.shape_cast %95 : vector<4x1x16xf32> to vector<4x16xf32>
    %97 = vector.shape_cast %94 : vector<4x16xf32> to vector<4x1x16xf32>
    tpu.vector_store %arg8[%c0_70, %c7, %c0_71], %97 {strides = array<i32>} : memref<4x16x16xf32, #tpu.memory_space<vmem>>, vector<4x1x16xf32>,
    %98 = vector.extract_strided_slice %7 {offsets = [0, 112], sizes = [4, 16], strides = [1, 1]} : vector<4x256xf32> to vector<4x16xf32>
    %c0_72 = arith.constant 0 : index
    %c7_73 = arith.constant 7 : index
    %c0_74 = arith.constant 0 : index
    %99 = vector.load %arg9[%c0_72, %c7_73, %c0_74] : memref<4x16x16xf32, #tpu.memory_space<vmem>>, vector<4x1x16xf32>
    %100 = vector.shape_cast %99 : vector<4x1x16xf32> to vector<4x16xf32>
    %101 = vector.shape_cast %98 : vector<4x16xf32> to vector<4x1x16xf32>
    tpu.vector_store %arg9[%c0_72, %c7_73, %c0_74], %101 {strides = array<i32>} : memref<4x16x16xf32, #tpu.memory_space<vmem>>, vector<4x1x16xf32>,
    %102 = vector.extract_strided_slice %9 {offsets = [0, 112], sizes = [4, 16], strides = [1, 1]} : vector<4x256xf32> to vector<4x16xf32>
    %c0_75 = arith.constant 0 : index
    %c7_76 = arith.constant 7 : index
    %c0_77 = arith.constant 0 : index
    %103 = vector.load %arg10[%c0_75, %c7_76, %c0_77] : memref<4x16x16xf32, #tpu.memory_space<vmem>>, vector<4x1x16xf32>
    %104 = vector.shape_cast %103 : vector<4x1x16xf32> to vector<4x16xf32>
    %105 = vector.shape_cast %102 : vector<4x16xf32> to vector<4x1x16xf32>
    tpu.vector_store %arg10[%c0_75, %c7_76, %c0_77], %105 {strides = array<i32>} : memref<4x16x16xf32, #tpu.memory_space<vmem>>, vector<4x1x16xf32>,
    %106 = vector.extract_strided_slice %5 {offsets = [0, 128], sizes = [4, 16], strides = [1, 1]} : vector<4x256xf32> to vector<4x16xf32>
    %c0_78 = arith.constant 0 : index
    %c8 = arith.constant 8 : index
    %c0_79 = arith.constant 0 : index
    %107 = vector.load %arg8[%c0_78, %c8, %c0_79] : memref<4x16x16xf32, #tpu.memory_space<vmem>>, vector<4x1x16xf32>
    %108 = vector.shape_cast %107 : vector<4x1x16xf32> to vector<4x16xf32>
    %109 = vector.shape_cast %106 : vector<4x16xf32> to vector<4x1x16xf32>
    tpu.vector_store %arg8[%c0_78, %c8, %c0_79], %109 {strides = array<i32>} : memref<4x16x16xf32, #tpu.memory_space<vmem>>, vector<4x1x16xf32>,
    %110 = vector.extract_strided_slice %7 {offsets = [0, 128], sizes = [4, 16], strides = [1, 1]} : vector<4x256xf32> to vector<4x16xf32>
    %c0_80 = arith.constant 0 : index
    %c8_81 = arith.constant 8 : index
    %c0_82 = arith.constant 0 : index
    %111 = vector.load %arg9[%c0_80, %c8_81, %c0_82] : memref<4x16x16xf32, #tpu.memory_space<vmem>>, vector<4x1x16xf32>
    %112 = vector.shape_cast %111 : vector<4x1x16xf32> to vector<4x16xf32>
    %113 = vector.shape_cast %110 : vector<4x16xf32> to vector<4x1x16xf32>
    tpu.vector_store %arg9[%c0_80, %c8_81, %c0_82], %113 {strides = array<i32>} : memref<4x16x16xf32, #tpu.memory_space<vmem>>, vector<4x1x16xf32>,
    %114 = vector.extract_strided_slice %9 {offsets = [0, 128], sizes = [4, 16], strides = [1, 1]} : vector<4x256xf32> to vector<4x16xf32>
    %c0_83 = arith.constant 0 : index
    %c8_84 = arith.constant 8 : index
    %c0_85 = arith.constant 0 : index
    %115 = vector.load %arg10[%c0_83, %c8_84, %c0_85] : memref<4x16x16xf32, #tpu.memory_space<vmem>>, vector<4x1x16xf32>
    %116 = vector.shape_cast %115 : vector<4x1x16xf32> to vector<4x16xf32>
    %117 = vector.shape_cast %114 : vector<4x16xf32> to vector<4x1x16xf32>
    tpu.vector_store %arg10[%c0_83, %c8_84, %c0_85], %117 {strides = array<i32>} : memref<4x16x16xf32, #tpu.memory_space<vmem>>, vector<4x1x16xf32>,
    %118 = vector.extract_strided_slice %5 {offsets = [0, 144], sizes = [4, 16], strides = [1, 1]} : vector<4x256xf32> to vector<4x16xf32>
    %c0_86 = arith.constant 0 : index
    %c9 = arith.constant 9 : index
    %c0_87 = arith.constant 0 : index
    %119 = vector.load %arg8[%c0_86, %c9, %c0_87] : memref<4x16x16xf32, #tpu.memory_space<vmem>>, vector<4x1x16xf32>
    %120 = vector.shape_cast %119 : vector<4x1x16xf32> to vector<4x16xf32>
    %121 = vector.shape_cast %118 : vector<4x16xf32> to vector<4x1x16xf32>
    tpu.vector_store %arg8[%c0_86, %c9, %c0_87], %121 {strides = array<i32>} : memref<4x16x16xf32, #tpu.memory_space<vmem>>, vector<4x1x16xf32>,
    %122 = vector.extract_strided_slice %7 {offsets = [0, 144], sizes = [4, 16], strides = [1, 1]} : vector<4x256xf32> to vector<4x16xf32>
    %c0_88 = arith.constant 0 : index
    %c9_89 = arith.constant 9 : index
    %c0_90 = arith.constant 0 : index
    %123 = vector.load %arg9[%c0_88, %c9_89, %c0_90] : memref<4x16x16xf32, #tpu.memory_space<vmem>>, vector<4x1x16xf32>
    %124 = vector.shape_cast %123 : vector<4x1x16xf32> to vector<4x16xf32>
    %125 = vector.shape_cast %122 : vector<4x16xf32> to vector<4x1x16xf32>
    tpu.vector_store %arg9[%c0_88, %c9_89, %c0_90], %125 {strides = array<i32>} : memref<4x16x16xf32, #tpu.memory_space<vmem>>, vector<4x1x16xf32>,
    %126 = vector.extract_strided_slice %9 {offsets = [0, 144], sizes = [4, 16], strides = [1, 1]} : vector<4x256xf32> to vector<4x16xf32>
    %c0_91 = arith.constant 0 : index
    %c9_92 = arith.constant 9 : index
    %c0_93 = arith.constant 0 : index
    %127 = vector.load %arg10[%c0_91, %c9_92, %c0_93] : memref<4x16x16xf32, #tpu.memory_space<vmem>>, vector<4x1x16xf32>
    %128 = vector.shape_cast %127 : vector<4x1x16xf32> to vector<4x16xf32>
    %129 = vector.shape_cast %126 : vector<4x16xf32> to vector<4x1x16xf32>
    tpu.vector_store %arg10[%c0_91, %c9_92, %c0_93], %129 {strides = array<i32>} : memref<4x16x16xf32, #tpu.memory_space<vmem>>, vector<4x1x16xf32>,
    %130 = vector.extract_strided_slice %5 {offsets = [0, 160], sizes = [4, 16], strides = [1, 1]} : vector<4x256xf32> to vector<4x16xf32>
    %c0_94 = arith.constant 0 : index
    %c10 = arith.constant 10 : index
    %c0_95 = arith.constant 0 : index
    %131 = vector.load %arg8[%c0_94, %c10, %c0_95] : memref<4x16x16xf32, #tpu.memory_space<vmem>>, vector<4x1x16xf32>
    %132 = vector.shape_cast %131 : vector<4x1x16xf32> to vector<4x16xf32>
    %133 = vector.shape_cast %130 : vector<4x16xf32> to vector<4x1x16xf32>
    tpu.vector_store %arg8[%c0_94, %c10, %c0_95], %133 {strides = array<i32>} : memref<4x16x16xf32, #tpu.memory_space<vmem>>, vector<4x1x16xf32>,
    %134 = vector.extract_strided_slice %7 {offsets = [0, 160], sizes = [4, 16], strides = [1, 1]} : vector<4x256xf32> to vector<4x16xf32>
    %c0_96 = arith.constant 0 : index
    %c10_97 = arith.constant 10 : index
    %c0_98 = arith.constant 0 : index
    %135 = vector.load %arg9[%c0_96, %c10_97, %c0_98] : memref<4x16x16xf32, #tpu.memory_space<vmem>>, vector<4x1x16xf32>
    %136 = vector.shape_cast %135 : vector<4x1x16xf32> to vector<4x16xf32>
    %137 = vector.shape_cast %134 : vector<4x16xf32> to vector<4x1x16xf32>
    tpu.vector_store %arg9[%c0_96, %c10_97, %c0_98], %137 {strides = array<i32>} : memref<4x16x16xf32, #tpu.memory_space<vmem>>, vector<4x1x16xf32>,
    %138 = vector.extract_strided_slice %9 {offsets = [0, 160], sizes = [4, 16], strides = [1, 1]} : vector<4x256xf32> to vector<4x16xf32>
    %c0_99 = arith.constant 0 : index
    %c10_100 = arith.constant 10 : index
    %c0_101 = arith.constant 0 : index
    %139 = vector.load %arg10[%c0_99, %c10_100, %c0_101] : memref<4x16x16xf32, #tpu.memory_space<vmem>>, vector<4x1x16xf32>
    %140 = vector.shape_cast %139 : vector<4x1x16xf32> to vector<4x16xf32>
    %141 = vector.shape_cast %138 : vector<4x16xf32> to vector<4x1x16xf32>
    tpu.vector_store %arg10[%c0_99, %c10_100, %c0_101], %141 {strides = array<i32>} : memref<4x16x16xf32, #tpu.memory_space<vmem>>, vector<4x1x16xf32>,
    %142 = vector.extract_strided_slice %5 {offsets = [0, 176], sizes = [4, 16], strides = [1, 1]} : vector<4x256xf32> to vector<4x16xf32>
    %c0_102 = arith.constant 0 : index
    %c11 = arith.constant 11 : index
    %c0_103 = arith.constant 0 : index
    %143 = vector.load %arg8[%c0_102, %c11, %c0_103] : memref<4x16x16xf32, #tpu.memory_space<vmem>>, vector<4x1x16xf32>
    %144 = vector.shape_cast %143 : vector<4x1x16xf32> to vector<4x16xf32>
    %145 = vector.shape_cast %142 : vector<4x16xf32> to vector<4x1x16xf32>
    tpu.vector_store %arg8[%c0_102, %c11, %c0_103], %145 {strides = array<i32>} : memref<4x16x16xf32, #tpu.memory_space<vmem>>, vector<4x1x16xf32>,
    %146 = vector.extract_strided_slice %7 {offsets = [0, 176], sizes = [4, 16], strides = [1, 1]} : vector<4x256xf32> to vector<4x16xf32>
    %c0_104 = arith.constant 0 : index
    %c11_105 = arith.constant 11 : index
    %c0_106 = arith.constant 0 : index
    %147 = vector.load %arg9[%c0_104, %c11_105, %c0_106] : memref<4x16x16xf32, #tpu.memory_space<vmem>>, vector<4x1x16xf32>
    %148 = vector.shape_cast %147 : vector<4x1x16xf32> to vector<4x16xf32>
    %149 = vector.shape_cast %146 : vector<4x16xf32> to vector<4x1x16xf32>
    tpu.vector_store %arg9[%c0_104, %c11_105, %c0_106], %149 {strides = array<i32>} : memref<4x16x16xf32, #tpu.memory_space<vmem>>, vector<4x1x16xf32>,
    %150 = vector.extract_strided_slice %9 {offsets = [0, 176], sizes = [4, 16], strides = [1, 1]} : vector<4x256xf32> to vector<4x16xf32>
    %c0_107 = arith.constant 0 : index
    %c11_108 = arith.constant 11 : index
    %c0_109 = arith.constant 0 : index
    %151 = vector.load %arg10[%c0_107, %c11_108, %c0_109] : memref<4x16x16xf32, #tpu.memory_space<vmem>>, vector<4x1x16xf32>
    %152 = vector.shape_cast %151 : vector<4x1x16xf32> to vector<4x16xf32>
    %153 = vector.shape_cast %150 : vector<4x16xf32> to vector<4x1x16xf32>
    tpu.vector_store %arg10[%c0_107, %c11_108, %c0_109], %153 {strides = array<i32>} : memref<4x16x16xf32, #tpu.memory_space<vmem>>, vector<4x1x16xf32>,
    %154 = vector.extract_strided_slice %5 {offsets = [0, 192], sizes = [4, 16], strides = [1, 1]} : vector<4x256xf32> to vector<4x16xf32>
    %c0_110 = arith.constant 0 : index
    %c12 = arith.constant 12 : index
    %c0_111 = arith.constant 0 : index
    %155 = vector.load %arg8[%c0_110, %c12, %c0_111] : memref<4x16x16xf32, #tpu.memory_space<vmem>>, vector<4x1x16xf32>
    %156 = vector.shape_cast %155 : vector<4x1x16xf32> to vector<4x16xf32>
    %157 = vector.shape_cast %154 : vector<4x16xf32> to vector<4x1x16xf32>
    tpu.vector_store %arg8[%c0_110, %c12, %c0_111], %157 {strides = array<i32>} : memref<4x16x16xf32, #tpu.memory_space<vmem>>, vector<4x1x16xf32>,
    %158 = vector.extract_strided_slice %7 {offsets = [0, 192], sizes = [4, 16], strides = [1, 1]} : vector<4x256xf32> to vector<4x16xf32>
    %c0_112 = arith.constant 0 : index
    %c12_113 = arith.constant 12 : index
    %c0_114 = arith.constant 0 : index
    %159 = vector.load %arg9[%c0_112, %c12_113, %c0_114] : memref<4x16x16xf32, #tpu.memory_space<vmem>>, vector<4x1x16xf32>
    %160 = vector.shape_cast %159 : vector<4x1x16xf32> to vector<4x16xf32>
    %161 = vector.shape_cast %158 : vector<4x16xf32> to vector<4x1x16xf32>
    tpu.vector_store %arg9[%c0_112, %c12_113, %c0_114], %161 {strides = array<i32>} : memref<4x16x16xf32, #tpu.memory_space<vmem>>, vector<4x1x16xf32>,
    %162 = vector.extract_strided_slice %9 {offsets = [0, 192], sizes = [4, 16], strides = [1, 1]} : vector<4x256xf32> to vector<4x16xf32>
    %c0_115 = arith.constant 0 : index
    %c12_116 = arith.constant 12 : index
    %c0_117 = arith.constant 0 : index
    %163 = vector.load %arg10[%c0_115, %c12_116, %c0_117] : memref<4x16x16xf32, #tpu.memory_space<vmem>>, vector<4x1x16xf32>
    %164 = vector.shape_cast %163 : vector<4x1x16xf32> to vector<4x16xf32>
    %165 = vector.shape_cast %162 : vector<4x16xf32> to vector<4x1x16xf32>
    tpu.vector_store %arg10[%c0_115, %c12_116, %c0_117], %165 {strides = array<i32>} : memref<4x16x16xf32, #tpu.memory_space<vmem>>, vector<4x1x16xf32>,
    %166 = vector.extract_strided_slice %5 {offsets = [0, 208], sizes = [4, 16], strides = [1, 1]} : vector<4x256xf32> to vector<4x16xf32>
    %c0_118 = arith.constant 0 : index
    %c13 = arith.constant 13 : index
    %c0_119 = arith.constant 0 : index
    %167 = vector.load %arg8[%c0_118, %c13, %c0_119] : memref<4x16x16xf32, #tpu.memory_space<vmem>>, vector<4x1x16xf32>
    %168 = vector.shape_cast %167 : vector<4x1x16xf32> to vector<4x16xf32>
    %169 = vector.shape_cast %166 : vector<4x16xf32> to vector<4x1x16xf32>
    tpu.vector_store %arg8[%c0_118, %c13, %c0_119], %169 {strides = array<i32>} : memref<4x16x16xf32, #tpu.memory_space<vmem>>, vector<4x1x16xf32>,
    %170 = vector.extract_strided_slice %7 {offsets = [0, 208], sizes = [4, 16], strides = [1, 1]} : vector<4x256xf32> to vector<4x16xf32>
    %c0_120 = arith.constant 0 : index
    %c13_121 = arith.constant 13 : index
    %c0_122 = arith.constant 0 : index
    %171 = vector.load %arg9[%c0_120, %c13_121, %c0_122] : memref<4x16x16xf32, #tpu.memory_space<vmem>>, vector<4x1x16xf32>
    %172 = vector.shape_cast %171 : vector<4x1x16xf32> to vector<4x16xf32>
    %173 = vector.shape_cast %170 : vector<4x16xf32> to vector<4x1x16xf32>
    tpu.vector_store %arg9[%c0_120, %c13_121, %c0_122], %173 {strides = array<i32>} : memref<4x16x16xf32, #tpu.memory_space<vmem>>, vector<4x1x16xf32>,
    %174 = vector.extract_strided_slice %9 {offsets = [0, 208], sizes = [4, 16], strides = [1, 1]} : vector<4x256xf32> to vector<4x16xf32>
    %c0_123 = arith.constant 0 : index
    %c13_124 = arith.constant 13 : index
    %c0_125 = arith.constant 0 : index
    %175 = vector.load %arg10[%c0_123, %c13_124, %c0_125] : memref<4x16x16xf32, #tpu.memory_space<vmem>>, vector<4x1x16xf32>
    %176 = vector.shape_cast %175 : vector<4x1x16xf32> to vector<4x16xf32>
    %177 = vector.shape_cast %174 : vector<4x16xf32> to vector<4x1x16xf32>
    tpu.vector_store %arg10[%c0_123, %c13_124, %c0_125], %177 {strides = array<i32>} : memref<4x16x16xf32, #tpu.memory_space<vmem>>, vector<4x1x16xf32>,
    %178 = vector.extract_strided_slice %5 {offsets = [0, 224], sizes = [4, 16], strides = [1, 1]} : vector<4x256xf32> to vector<4x16xf32>
    %c0_126 = arith.constant 0 : index
    %c14 = arith.constant 14 : index
    %c0_127 = arith.constant 0 : index
    %179 = vector.load %arg8[%c0_126, %c14, %c0_127] : memref<4x16x16xf32, #tpu.memory_space<vmem>>, vector<4x1x16xf32>
    %180 = vector.shape_cast %179 : vector<4x1x16xf32> to vector<4x16xf32>
    %181 = vector.shape_cast %178 : vector<4x16xf32> to vector<4x1x16xf32>
    tpu.vector_store %arg8[%c0_126, %c14, %c0_127], %181 {strides = array<i32>} : memref<4x16x16xf32, #tpu.memory_space<vmem>>, vector<4x1x16xf32>,
    %182 = vector.extract_strided_slice %7 {offsets = [0, 224], sizes = [4, 16], strides = [1, 1]} : vector<4x256xf32> to vector<4x16xf32>
    %c0_128 = arith.constant 0 : index
    %c14_129 = arith.constant 14 : index
    %c0_130 = arith.constant 0 : index
    %183 = vector.load %arg9[%c0_128, %c14_129, %c0_130] : memref<4x16x16xf32, #tpu.memory_space<vmem>>, vector<4x1x16xf32>
    %184 = vector.shape_cast %183 : vector<4x1x16xf32> to vector<4x16xf32>
    %185 = vector.shape_cast %182 : vector<4x16xf32> to vector<4x1x16xf32>
    tpu.vector_store %arg9[%c0_128, %c14_129, %c0_130], %185 {strides = array<i32>} : memref<4x16x16xf32, #tpu.memory_space<vmem>>, vector<4x1x16xf32>,
    %186 = vector.extract_strided_slice %9 {offsets = [0, 224], sizes = [4, 16], strides = [1, 1]} : vector<4x256xf32> to vector<4x16xf32>
    %c0_131 = arith.constant 0 : index
    %c14_132 = arith.constant 14 : index
    %c0_133 = arith.constant 0 : index
    %187 = vector.load %arg10[%c0_131, %c14_132, %c0_133] : memref<4x16x16xf32, #tpu.memory_space<vmem>>, vector<4x1x16xf32>
    %188 = vector.shape_cast %187 : vector<4x1x16xf32> to vector<4x16xf32>
    %189 = vector.shape_cast %186 : vector<4x16xf32> to vector<4x1x16xf32>
    tpu.vector_store %arg10[%c0_131, %c14_132, %c0_133], %189 {strides = array<i32>} : memref<4x16x16xf32, #tpu.memory_space<vmem>>, vector<4x1x16xf32>,
    %190 = vector.extract_strided_slice %5 {offsets = [0, 240], sizes = [4, 16], strides = [1, 1]} : vector<4x256xf32> to vector<4x16xf32>
    %c0_134 = arith.constant 0 : index
    %c15 = arith.constant 15 : index
    %c0_135 = arith.constant 0 : index
    %191 = vector.load %arg8[%c0_134, %c15, %c0_135] : memref<4x16x16xf32, #tpu.memory_space<vmem>>, vector<4x1x16xf32>
    %192 = vector.shape_cast %191 : vector<4x1x16xf32> to vector<4x16xf32>
    %193 = vector.shape_cast %190 : vector<4x16xf32> to vector<4x1x16xf32>
    tpu.vector_store %arg8[%c0_134, %c15, %c0_135], %193 {strides = array<i32>} : memref<4x16x16xf32, #tpu.memory_space<vmem>>, vector<4x1x16xf32>,
    %194 = vector.extract_strided_slice %7 {offsets = [0, 240], sizes = [4, 16], strides = [1, 1]} : vector<4x256xf32> to vector<4x16xf32>
    %c0_136 = arith.constant 0 : index
    %c15_137 = arith.constant 15 : index
    %c0_138 = arith.constant 0 : index
    %195 = vector.load %arg9[%c0_136, %c15_137, %c0_138] : memref<4x16x16xf32, #tpu.memory_space<vmem>>, vector<4x1x16xf32>
    %196 = vector.shape_cast %195 : vector<4x1x16xf32> to vector<4x16xf32>
    %197 = vector.shape_cast %194 : vector<4x16xf32> to vector<4x1x16xf32>
    tpu.vector_store %arg9[%c0_136, %c15_137, %c0_138], %197 {strides = array<i32>} : memref<4x16x16xf32, #tpu.memory_space<vmem>>, vector<4x1x16xf32>,
    %198 = vector.extract_strided_slice %9 {offsets = [0, 240], sizes = [4, 16], strides = [1, 1]} : vector<4x256xf32> to vector<4x16xf32>
    %c0_139 = arith.constant 0 : index
    %c15_140 = arith.constant 15 : index
    %c0_141 = arith.constant 0 : index
    %199 = vector.load %arg10[%c0_139, %c15_140, %c0_141] : memref<4x16x16xf32, #tpu.memory_space<vmem>>, vector<4x1x16xf32>
    %200 = vector.shape_cast %199 : vector<4x1x16xf32> to vector<4x16xf32>
    %201 = vector.shape_cast %198 : vector<4x16xf32> to vector<4x1x16xf32>
    tpu.vector_store %arg10[%c0_139, %c15_140, %c0_141], %201 {strides = array<i32>} : memref<4x16x16xf32, #tpu.memory_space<vmem>>, vector<4x1x16xf32>,
    %c0_142 = arith.constant 0 : index
    %c0_143 = arith.constant 0 : index
    %c0_144 = arith.constant 0 : index
    %202 = vector.load %arg8[%c0_142, %c0_143, %c0_144] : memref<4x16x16xf32, #tpu.memory_space<vmem>>, vector<4x16x16xf32>
    %c0_145 = arith.constant 0 : index
    %c0_146 = arith.constant 0 : index
    %c0_147 = arith.constant 0 : index
    %203 = vector.load %arg9[%c0_145, %c0_146, %c0_147] : memref<4x16x16xf32, #tpu.memory_space<vmem>>, vector<4x16x16xf32>
    %c0_148 = arith.constant 0 : index
    %c0_149 = arith.constant 0 : index
    %c0_150 = arith.constant 0 : index
    %204 = vector.load %arg10[%c0_148, %c0_149, %c0_150] : memref<4x16x16xf32, #tpu.memory_space<vmem>>, vector<4x16x16xf32>
    "tpu.trace_start"() <{level = 10 : i32, message = "chw,cgw->chg"}> : () -> ()
    %cst_151 = arith.constant dense<0.000000e+00> : vector<4x16x16xf32>
    %205 = tpu.matmul %202, %203, %cst_151 {dimension_numbers = #tpu.dot_dimension_numbers<[2], [2], [1], [1], [0, 0, 0, 1, 1, 1], [0], [0]>} : vector<4x16x16xf32>, vector<4x16x16xf32>, vector<4x16x16xf32> -> vector<4x16x16xf32>
    "tpu.trace_stop"() : () -> ()
    %cst_152 = arith.constant dense<0xFF800000> : vector<4x16xf32>
    %206 = vector.multi_reduction <maximumf>, %205, %cst_152 [2] : vector<4x16x16xf32> to vector<4x16xf32>
    %207 = vector.shape_cast %206 : vector<4x16xf32> to vector<4x16x1xf32>
    %208 = vector.broadcast %207 : vector<4x16x1xf32> to vector<4x16x16xf32>
    %209 = arith.subf %205, %208 : vector<4x16x16xf32>
    %210 = math.exp %209 : vector<4x16x16xf32>
    %cst_153 = arith.constant dense<0.000000e+00> : vector<4x16xf32>
    %211 = vector.multi_reduction <add>, %210, %cst_153 [2] : vector<4x16x16xf32> to vector<4x16xf32>
    %212 = vector.shape_cast %211 : vector<4x16xf32> to vector<4x16x1xf32>
    %213 = tpu.reciprocal %212 : vector<4x16x1xf32> -> vector<4x16x1xf32>
    %214 = vector.broadcast %213 : vector<4x16x1xf32> to vector<4x16x16xf32>
    %215 = arith.mulf %210, %214 : vector<4x16x16xf32>
    "tpu.trace_start"() <{level = 10 : i32, message = "chg,cgw->chw"}> : () -> ()
    %cst_154 = arith.constant dense<0.000000e+00> : vector<4x16x16xf32>
    %216 = tpu.matmul %215, %204, %cst_154 {dimension_numbers = #tpu.dot_dimension_numbers<[2], [1], [1], [2], [0, 0, 0, 1, 1, 2], [0], [0]>} : vector<4x16x16xf32>, vector<4x16x16xf32>, vector<4x16x16xf32> -> vector<4x16x16xf32>
    "tpu.trace_stop"() : () -> ()
    %c0_155 = arith.constant 0 : index
    %c0_156 = arith.constant 0 : index
    %c0_157 = arith.constant 0 : index
    %c0_158 = arith.constant 0 : index
    %217 = vector.load %arg7[%c0_155, %c0_156, %c0_157, %c0_158] : memref<1x4x16x16xf32, #tpu.memory_space<vmem>>, vector<1x4x16x16xf32>
    %218 = vector.shape_cast %217 : vector<1x4x16x16xf32> to vector<4x16x16xf32>
    %219 = vector.shape_cast %216 : vector<4x16x16xf32> to vector<1x4x16x16xf32>
    tpu.vector_store %arg7[%c0_155, %c0_156, %c0_157, %c0_158], %219 {strides = array<i32>} : memref<1x4x16x16xf32, #tpu.memory_space<vmem>>, vector<1x4x16x16xf32>,
    return
  }
  func.func @transform_0(%arg0: i32, %arg1: i32) -> (i32, i32) {
    %c0_i32 = arith.constant 0 : i32
    %c0_i32_0 = arith.constant 0 : i32
    return %arg1, %c0_i32 : i32, i32
  }
  func.func @transform_1(%arg0: i32, %arg1: i32) -> (i32, i32) {
    %c0_i32 = arith.constant 0 : i32
    %c0_i32_0 = arith.constant 0 : i32
    return %arg1, %c0_i32 : i32, i32
  }
  func.func @transform_2(%arg0: i32, %arg1: i32) -> (i32, i32) {
    %c0_i32 = arith.constant 0 : i32
    %c0_i32_0 = arith.constant 0 : i32
    return %arg1, %c0_i32 : i32, i32
  }
  func.func @transform_3(%arg0: i32, %arg1: i32) -> (i32, i32, i32) {
    %c0_i32 = arith.constant 0 : i32
    %c0_i32_0 = arith.constant 0 : i32
    %c0_i32_1 = arith.constant 0 : i32
    return %arg0, %c0_i32, %c0_i32_0 : i32, i32, i32
  }
  func.func @transform_4(%arg0: i32, %arg1: i32) -> (i32, i32, i32) {
    %c0_i32 = arith.constant 0 : i32
    %c0_i32_0 = arith.constant 0 : i32
    %c0_i32_1 = arith.constant 0 : i32
    return %arg0, %c0_i32, %c0_i32_0 : i32, i32, i32
  }
  func.func @transform_5(%arg0: i32, %arg1: i32) -> (i32, i32, i32, i32) {
    %c0_i32 = arith.constant 0 : i32
    %c0_i32_0 = arith.constant 0 : i32
    %c0_i32_1 = arith.constant 0 : i32
    return %arg0, %arg1, %c0_i32, %c0_i32_0 : i32, i32, i32, i32
  }
}

</mosaic_0001>

<llo_original>
// kernel: tpu_custom_call.1
$region0: #{tpu_custom_call.1}
  #allocation0 [shape = 'u32[]', space=smem, size = 0x4, offset = 0x4, fixed_abs, tag = 'smem constant byte address 0x4 - core index']
  #allocation1 [shape = 'u32[144,128]{1,0:T(1,128)}', space=vmem, size = 0x12000, scoped, tag = 'internal scratch']
  #allocation2 [shape = 'f32[4,16,16]{2,1,0:T(8,128)}', space=vmem, size = 0x8000, scoped, tag = 'scratch operand']
  #allocation3 [shape = 'f32[4,16,16]{2,1,0:T(8,128)}', space=vmem, size = 0x8000, scoped, tag = 'scratch operand']
  #allocation4 [shape = 'f32[4,16,16]{2,1,0:T(8,128)}', space=vmem, size = 0x8000, scoped, tag = 'scratch operand']
  %s0 = inlined_call_operand.hbm [shape: f32[4,4], index: 0, kind: input, shape index: {}]
  %s1 = inlined_call_operand.hbm [shape: f32[4,4], index: 1, kind: input, shape index: {}]
  %s2 = inlined_call_operand.vmem [shape: f32[4,4], index: 2, kind: input, shape index: {}]
  %s3 = inlined_call_operand.hbm [shape: f32[2,4,256], index: 3, kind: input, shape index: {}]
  %s4 = inlined_call_operand.hbm [shape: f32[2,4,256], index: 4, kind: input, shape index: {}]
  %s5 = inlined_call_operand.hbm [shape: f32[2,4,16,16], index: 5, kind: output, shape index: {}]
  %s6 = sld [smem:[#allocation0]]
  $region69: #{tpu_custom_call.1} parent=0
    _
  %s8 = ssub.s32 1, %s6
  %s9 = scalar_select 0, %s8, %s6
  $region1: #{tpu_custom_call.1} parent=0
    #allocation5 [shape = 'u8[2048]{0}', space=vmem, size = 0x800, scoped, tag = 'input window, operand 0, single buffered']
    #allocation6 [shape = 's32[2]{0}', space=sflag, size = 0x8, scoped, tag = 'scoped memory for tpu_custom_call.1']
    #allocation7 [shape = 's32[2]{0}', space=sflag, size = 0x8, scoped, tag = 'scoped memory for tpu_custom_call.1']
    #allocation8 [shape = 'u8[2048]{0}', space=vmem, size = 0x800, scoped, tag = 'input window, operand 1, single buffered']
    #allocation9 [shape = 's32[1]{0}', space=sflag, size = 0x4, scoped, tag = 'scoped memory for tpu_custom_call.1']
    #allocation10 [shape = 'u8[8192]{0}', space=vmem, size = 0x2000, scoped, tag = 'input window, operand 3']
    #allocation11 [shape = 'u8[8192]{0}', space=vmem, size = 0x2000, scoped, tag = 'input window, operand 4']
    #allocation12 [shape = 'u8[65536]{0}', space=vmem, size = 0x10000, scoped, tag = 'output window, operand 0']
    %10 = vsyncpa [#allocation6], 0
    %11 = vsyncpa [#allocation9], 0
    %12 = vsyncpa [#allocation7], 0
    %s13 = scalar_lea.sflag [#allocation7], 1
    %14 = vsyncpa %s13, 0
    loop: start=0, step=1, limit=4
    $region2: #{tpu_custom_call.1} parent=1 // loop_pre_header
      _
    $region3: #{tpu_custom_call.1} parent=1 // loop_header
      %s16 = sphi 0, %s20
      %p17 = scmp.ge.s32.totalorder %s16, 4
      %s23 = sphi 0, %s35
      %s24 = sphi 0, %s31
      %s25 = sphi 0, %s23
      %s26 = sphi 0, %s24
      %s27 = sphi 0, %s25
      %s28 = sphi 0, %s26
      %s38 = sphi 0, %s40
      %s41 = sphi 0, %s38
      %s42 = sphi 0, %s41
      %s58 = sphi 0, %s42
      %s64 = sphi 0, %s66
      %s67 = sphi 0, %s64
      %s68 = sphi 0, %s67
      %s84 = sphi 0, %s68
      %s90 = sphi 0, %s92
      %s93 = sphi 0, %s90
      %s94 = sphi 0, %s93
      %s110 = sphi 0, %s94
      %s116 = sphi 0, %s118
      %s119 = sphi 0, %s116
      %s120 = sphi 0, %s119
      %s136 = sphi 0, %s120
      %s142 = sphi 0, %s144
      %s145 = sphi 0, %s142
      %s146 = sphi 0, %s145
      %s162 = sphi 0, %s146
      %s170 = sphi 0, %s172
      %s173 = sphi 0, %s170
      %s174 = sphi 0, %s173
      %s190 = sphi 0, %s174
    $region4: #{tpu_custom_call.1} parent=1 // loop_header_branch
      %19 = sbr.rel (%p17) target = $region8
    $region5: #{tpu_custom_call.1} parent=1 // loop_body
      %s21 = ssub.s32 %s16, 1
      %s22 = ssub.s32 %s16, 2
      %s29 = sadd.s32 1, %s24
      %p30 = scmp.ge.s32.totalorder %s29, 1
      %s31 = scalar_select %p30, 0, %s29
      %s32 = sadd.s32 1, %s23
      %s33 = scalar_select %p30, %s32, %s23
      %p34 = scmp.ge.s32.totalorder %s33, 2
      %s35 = scalar_select %p34, 0, %s33
      %s36 = ssub.s32 %s24, %s31
      %p37 = scmp.eq.s32.totalorder %s36, 0
      %s39 = sadd.s32 %s38, 1
      %s40 = scalar_select %p37, %s38, %s39
      %p43 = pneg %p37
      %p44 = scmp.eq.s32.totalorder %s16, 1
      %p45 = por %p43, %p44
      %p46 = scmp.ne.s32.totalorder %s38, %s41
      %p47 = scmp.eq.s32.totalorder %s16, 0
      %p48 = por %p46, %p47
      %p49 = scmp.ne.s32.totalorder %s38, %s41
      %p50 = scmp.eq.s32.totalorder %s21, 1
      %p51 = por %p49, %p50
      %p52 = scmp.ne.s32.totalorder %s41, %s42
      %p53 = scmp.eq.s32.totalorder %s21, 0
      %p54 = por %p52, %p53
      %p55 = scmp.ne.s32.totalorder %s41, %s42
      %p56 = scmp.eq.s32.totalorder %s22, 1
      %p57 = por %p55, %p56
      %p59 = scmp.ne.s32.totalorder %s42, %s58
      %p60 = scmp.eq.s32.totalorder %s22, 0
      %p61 = por %p59, %p60
      %s62 = ssub.s32 %s24, %s31
      %p63 = scmp.eq.s32.totalorder %s62, 0
      %s65 = sadd.s32 %s64, 1
      %s66 = scalar_select %p63, %s64, %s65
      %p69 = pneg %p63
      %p70 = scmp.eq.s32.totalorder %s16, 1
      %p71 = por %p69, %p70
      %p72 = scmp.ne.s32.totalorder %s64, %s67
      %p73 = scmp.eq.s32.totalorder %s16, 0
      %p74 = por %p72, %p73
      %p75 = scmp.ne.s32.totalorder %s64, %s67
      %p76 = scmp.eq.s32.totalorder %s21, 1
      %p77 = por %p75, %p76
      %p78 = scmp.ne.s32.totalorder %s67, %s68
      %p79 = scmp.eq.s32.totalorder %s21, 0
      %p80 = por %p78, %p79
      %p81 = scmp.ne.s32.totalorder %s67, %s68
      %p82 = scmp.eq.s32.totalorder %s22, 1
      %p83 = por %p81, %p82
      %p85 = scmp.ne.s32.totalorder %s68, %s84
      %p86 = scmp.eq.s32.totalorder %s22, 0
      %p87 = por %p85, %p86
      %s88 = ssub.s32 %s24, %s31
      %p89 = scmp.eq.s32.totalorder %s88, 0
      %s91 = sadd.s32 %s90, 1
      %s92 = scalar_select %p89, %s90, %s91
      %p95 = pneg %p89
      %p96 = scmp.eq.s32.totalorder %s16, 1
      %p97 = por %p95, %p96
      %p98 = scmp.ne.s32.totalorder %s90, %s93
      %p99 = scmp.eq.s32.totalorder %s16, 0
      %p100 = por %p98, %p99
      %p101 = scmp.ne.s32.totalorder %s90, %s93
      %p102 = scmp.eq.s32.totalorder %s21, 1
      %p103 = por %p101, %p102
      %p104 = scmp.ne.s32.totalorder %s93, %s94
      %p105 = scmp.eq.s32.totalorder %s21, 0
      %p106 = por %p104, %p105
      %p107 = scmp.ne.s32.totalorder %s93, %s94
      %p108 = scmp.eq.s32.totalorder %s22, 1
      %p109 = por %p107, %p108
      %p111 = scmp.ne.s32.totalorder %s94, %s110
      %p112 = scmp.eq.s32.totalorder %s22, 0
      %p113 = por %p111, %p112
      %s114 = ssub.s32 %s23, %s35
      %p115 = scmp.eq.s32.totalorder %s114, 0
      %s117 = sadd.s32 %s116, 1
      %s118 = scalar_select %p115, %s116, %s117
      %p121 = pneg %p115
      %p122 = scmp.eq.s32.totalorder %s16, 1
      %p123 = por %p121, %p122
      %p124 = scmp.ne.s32.totalorder %s116, %s119
      %p125 = scmp.eq.s32.totalorder %s16, 0
      %p126 = por %p124, %p125
      %p127 = scmp.ne.s32.totalorder %s116, %s119
      %p128 = scmp.eq.s32.totalorder %s21, 1
      %p129 = por %p127, %p128
      %p130 = scmp.ne.s32.totalorder %s119, %s120
      %p131 = scmp.eq.s32.totalorder %s21, 0
      %p132 = por %p130, %p131
      %p133 = scmp.ne.s32.totalorder %s119, %s120
      %p134 = scmp.eq.s32.totalorder %s22, 1
      %p135 = por %p133, %p134
      %p137 = scmp.ne.s32.totalorder %s120, %s136
      %p138 = scmp.eq.s32.totalorder %s22, 0
      %p139 = por %p137, %p138
      %s140 = ssub.s32 %s23, %s35
      %p141 = scmp.eq.s32.totalorder %s140, 0
      %s143 = sadd.s32 %s142, 1
      %s144 = scalar_select %p141, %s142, %s143
      %p147 = pneg %p141
      %p148 = scmp.eq.s32.totalorder %s16, 1
      %p149 = por %p147, %p148
      %p150 = scmp.ne.s32.totalorder %s142, %s145
      %p151 = scmp.eq.s32.totalorder %s16, 0
      %p152 = por %p150, %p151
      %p153 = scmp.ne.s32.totalorder %s142, %s145
      %p154 = scmp.eq.s32.totalorder %s21, 1
      %p155 = por %p153, %p154
      %p156 = scmp.ne.s32.totalorder %s145, %s146
      %p157 = scmp.eq.s32.totalorder %s21, 0
      %p158 = por %p156, %p157
      %p159 = scmp.ne.s32.totalorder %s145, %s146
      %p160 = scmp.eq.s32.totalorder %s22, 1
      %p161 = por %p159, %p160
      %p163 = scmp.ne.s32.totalorder %s146, %s162
      %p164 = scmp.eq.s32.totalorder %s22, 0
      %p165 = por %p163, %p164
      %s166 = ssub.s32 %s23, %s35
      %s167 = ssub.s32 %s24, %s31
      %s168 = sor.u32 %s166, %s167
      %p169 = scmp.eq.s32.totalorder %s168, 0
      %s171 = sadd.s32 %s170, 1
      %s172 = scalar_select %p169, %s170, %s171
      %p175 = pneg %p169
      %p176 = scmp.eq.s32.totalorder %s16, 1
      %p177 = por %p175, %p176
      %p178 = scmp.ne.s32.totalorder %s170, %s173
      %p179 = scmp.eq.s32.totalorder %s16, 0
      %p180 = por %p178, %p179
      %p181 = scmp.ne.s32.totalorder %s170, %s173
      %p182 = scmp.eq.s32.totalorder %s21, 1
      %p183 = por %p181, %p182
      %p184 = scmp.ne.s32.totalorder %s173, %s174
      %p185 = scmp.eq.s32.totalorder %s21, 0
      %p186 = por %p184, %p185
      %p187 = scmp.ne.s32.totalorder %s173, %s174
      %p188 = scmp.eq.s32.totalorder %s22, 1
      %p189 = por %p187, %p188
      %p191 = scmp.ne.s32.totalorder %s174, %s190
      %p192 = scmp.eq.s32.totalorder %s22, 0
      %p193 = por %p191, %p192
      %p194 = scmp.le.s32.totalorder 1, %s16
      %p195 = scmp.lt.s32.totalorder %s16, 3
      %p196 = pnand %p194, %p195
      %p197 = pneg %p196
      // Predicated region
      $region9: #{tpu_custom_call.1} parent=5 // pred_check
        _
      $region10: #{tpu_custom_call.1} parent=5 // pred_check_branch
        %199 = sbr.rel (%p196) target = $region12
      $region11: #{tpu_custom_call.1} parent=5 // pred_region
        %s200 = ssub.s32 %s16, 1
        // Predicated region
        $region13: #{tpu_custom_call.1} parent=11 // pred_check
          %p201 = pneg %p54
        $region14: #{tpu_custom_call.1} parent=11 // pred_check_branch
          %203 = sbr.rel (%p201) target = $region16
        $region15: #{tpu_custom_call.1} parent=11 // pred_region
          %s205 = ssub.s32 64, 64
          %206 = vsyncadd [#allocation6], %s205
          %s207 = smul.addr %s26, 64
          %s208 = scalar_lea.hbm %s0, %s207
          %s210 = sshll.u32 [#allocation5], 4
          %s211 = int_to_ptr.vmem [resolvable:$true] %s210
          %213 = dma.hbm_to_vmem [thread:$0]  %s208, 64, %s211, [#allocation6]
        $region16: #{tpu_custom_call.1} parent=11 // pred_fallthru
          _
        // Predicated region
        $region17: #{tpu_custom_call.1} parent=11 // pred_check
          %p214 = pneg %p80
        $region18: #{tpu_custom_call.1} parent=11 // pred_check_branch
          %216 = sbr.rel (%p214) target = $region20
        $region19: #{tpu_custom_call.1} parent=11 // pred_region
          %s218 = ssub.s32 64, 64
          %219 = vsyncadd [#allocation9], %s218
          %s220 = smul.addr %s26, 64
          %s221 = scalar_lea.hbm %s1, %s220
          %s223 = sshll.u32 [#allocation8], 4
          %s224 = int_to_ptr.vmem [resolvable:$true] %s223
          %226 = dma.hbm_to_vmem [thread:$0]  %s221, 64, %s224, [#allocation9]
        $region20: #{tpu_custom_call.1} parent=11 // pred_fallthru
          _
        // Predicated region
        $region21: #{tpu_custom_call.1} parent=11 // pred_check
          %p227 = pneg %p106
        $region22: #{tpu_custom_call.1} parent=11 // pred_check_branch
          %229 = sbr.rel (%p227) target = $region24
        $region23: #{tpu_custom_call.1} parent=11 // pred_region
          %p230 = scmp.lt.s32.totalorder %s26, 0
          %s231 = scalar_select %p230, %s26, 0
          %s232 = smul.addr %s231, 4
          %s233 = scalar_lea.vmem %s2, %s232
        $region24: #{tpu_custom_call.1} parent=11 // pred_fallthru
          _
      $region12: #{tpu_custom_call.1} parent=5 // pred_fallthru
        _
      %p234 = scmp.lt.s32.totalorder %s16, 2
      // Predicated region
      $region25: #{tpu_custom_call.1} parent=5 // pred_check
        %p235 = pneg %p234
      $region26: #{tpu_custom_call.1} parent=5 // pred_check_branch
        %237 = sbr.rel (%p235) target = $region28
      $region27: #{tpu_custom_call.1} parent=5 // pred_region
        // Predicated region
        $region29: #{tpu_custom_call.1} parent=27 // pred_check
          %p238 = pneg %p126
        $region30: #{tpu_custom_call.1} parent=27 // pred_check_branch
          %240 = sbr.rel (%p238) target = $region32
        $region31: #{tpu_custom_call.1} parent=27 // pred_region
          %s241 = sand.u32 %s16, 1
          %s242 = scalar_lea.sflag [#allocation6], %s241
          %s243 = sand.u32 %s116, 1
          %s244 = smul.addr %s243, 8
          %s245 = scalar_lea.vmem [#allocation10], %s244
          %s247 = ssub.s32 128, 128
          %248 = vsyncadd %s242, %s247
          %s249 = smul.addr %s23, 2
          %s250 = smul.addr %s249, 64
          %s251 = scalar_lea.hbm %s3, %s250
          %s253 = sshll.u32 %s245, 4
          %s254 = int_to_ptr.vmem [resolvable:$true] %s253
          %256 = dma.hbm_to_vmem [thread:$0]  %s251, 128, %s254, %s242
        $region32: #{tpu_custom_call.1} parent=27 // pred_fallthru
          _
        // Predicated region
        $region33: #{tpu_custom_call.1} parent=27 // pred_check
          %p257 = pneg %p152
        $region34: #{tpu_custom_call.1} parent=27 // pred_check_branch
          %259 = sbr.rel (%p257) target = $region36
        $region35: #{tpu_custom_call.1} parent=27 // pred_region
          %s260 = sand.u32 %s16, 1
          %s261 = scalar_lea.sflag [#allocation6], %s260
          %s262 = sand.u32 %s142, 1
          %s263 = smul.addr %s262, 8
          %s264 = scalar_lea.vmem [#allocation11], %s263
          %s266 = ssub.s32 128, 128
          %267 = vsyncadd %s261, %s266
          %s268 = smul.addr %s23, 2
          %s269 = smul.addr %s268, 64
          %s270 = scalar_lea.hbm %s4, %s269
          %s272 = sshll.u32 %s264, 4
          %s273 = int_to_ptr.vmem [resolvable:$true] %s272
          %275 = dma.hbm_to_vmem [thread:$0]  %s270, 128, %s273, %s261
        $region36: #{tpu_custom_call.1} parent=27 // pred_fallthru
          _
      $region28: #{tpu_custom_call.1} parent=5 // pred_fallthru
        _
      %p276 = scmp.le.s32.totalorder 1, %s16
      %p277 = scmp.lt.s32.totalorder %s16, 3
      %p278 = pnand %p276, %p277
      %p279 = pneg %p278
      // Predicated region
      $region37: #{tpu_custom_call.1} parent=5 // pred_check
        _
      $region38: #{tpu_custom_call.1} parent=5 // pred_check_branch
        %281 = sbr.rel (%p278) target = $region40
      $region39: #{tpu_custom_call.1} parent=5 // pred_region
        %s282 = ssub.s32 %s16, 1
        // Predicated region
        $region41: #{tpu_custom_call.1} parent=39 // pred_check
          %p283 = pneg %p54
        $region42: #{tpu_custom_call.1} parent=39 // pred_check_branch
          %285 = sbr.rel (%p283) target = $region44
        $region43: #{tpu_custom_call.1} parent=39 // pred_region
          %286 = dma.done [#allocation6], 64
        $region44: #{tpu_custom_call.1} parent=39 // pred_fallthru
          _
        // Predicated region
        $region45: #{tpu_custom_call.1} parent=39 // pred_check
          %p287 = pneg %p80
        $region46: #{tpu_custom_call.1} parent=39 // pred_check_branch
          %289 = sbr.rel (%p287) target = $region48
        $region47: #{tpu_custom_call.1} parent=39 // pred_region
          %290 = dma.done [#allocation9], 64
        $region48: #{tpu_custom_call.1} parent=39 // pred_fallthru
          _
        %s291 = sand.u32 %s21, 1
        %s292 = scalar_lea.sflag [#allocation6], %s291
        %s293 = sand.u32 %s119, 1
        %s294 = smul.addr %s293, 8
        %s295 = scalar_lea.vmem [#allocation10], %s294
        // Predicated region
        $region49: #{tpu_custom_call.1} parent=39 // pred_check
          %p296 = pneg %p132
        $region50: #{tpu_custom_call.1} parent=39 // pred_check_branch
          %298 = sbr.rel (%p296) target = $region52
        $region51: #{tpu_custom_call.1} parent=39 // pred_region
          %299 = dma.done %s292, 128
        $region52: #{tpu_custom_call.1} parent=39 // pred_fallthru
          _
        %s300 = sand.u32 %s21, 1
        %s301 = scalar_lea.sflag [#allocation6], %s300
        %s302 = sand.u32 %s145, 1
        %s303 = smul.addr %s302, 8
        %s304 = scalar_lea.vmem [#allocation11], %s303
        // Predicated region
        $region53: #{tpu_custom_call.1} parent=39 // pred_check
          %p305 = pneg %p158
        $region54: #{tpu_custom_call.1} parent=39 // pred_check_branch
          %307 = sbr.rel (%p305) target = $region56
        $region55: #{tpu_custom_call.1} parent=39 // pred_region
          %308 = dma.done %s301, 128
        $region56: #{tpu_custom_call.1} parent=39 // pred_fallthru
          _
        %p309 = pneg %p54
        %p310 = pneg %p51
        %p311 = pneg %p80
        %p312 = pneg %p77
        %p313 = scmp.lt.s32.totalorder %s26, 0
        %s314 = scalar_select %p313, %s26, 0
        %s315 = smul.addr %s314, 4
        %s316 = scalar_lea.vmem %s2, %s315
        %p317 = pneg %p106
        %p318 = pneg %p103
        %s319 = sand.u32 %s21, 1
        %s320 = scalar_lea.sflag [#allocation6], %s319
        %s321 = sand.u32 %s119, 1
        %s322 = smul.addr %s321, 8
        %s323 = scalar_lea.vmem [#allocation10], %s322
        %p324 = pneg %p132
        %p325 = pneg %p129
        %s326 = sand.u32 %s21, 1
        %s327 = scalar_lea.sflag [#allocation6], %s326
        %s328 = sand.u32 %s145, 1
        %s329 = smul.addr %s328, 8
        %s330 = scalar_lea.vmem [#allocation11], %s329
        %p331 = pneg %p158
        %p332 = pneg %p155
        %p333 = pneg %p186
        %p334 = pneg %p183
        %s335 = sand.u32 %s173, 1
        %s336 = scalar_lea.sflag [#allocation7], %s335
        %s337 = sand.u32 %s173, 1
        %s338 = smul.addr %s337, 64
        %s339 = scalar_lea.vmem [#allocation12], %s338
        %p340 = scmp.lt.s32.totalorder %s26, 0
        %s341 = scalar_select %p340, %s26, 0
        %s342 = smul.addr %s341, 4
        %s343 = scalar_lea.vmem %s2, %s342
        %s344 = smul.u32 4, %s26
        %v345 = vld [vmem:[%s295] sm:$0xff]
        %v346 = vld [vmem:[%s304] sm:$0xff]
        %v347 = vld [vmem:[#allocation5] sm:$0xf]
        %v349 = vcombine.high %v345, %v345
        %vm350 = vcmask 31744
        %v352 = vsel %vm350, %v347, 0
        %vm354 = vcmask 1043456
        %v355 = vsel %vm354, %v345, 0
        %v357 = vsel %vm354, %v349, 0
        %359 = vmatprep.subr.mxu0 %v357
        %360 = vmatpush1.msra.mxu0 %v355
        %361 = vmatprep.subr.mxu0 0.0
        %362 = vmatpush1.msra.mxu0 0.0
        %363 = vmatprep.subr.mxu0 0.0
        %364 = vmatpush1.msra.mxu0 0.0
        %365 = vmatprep.subr.mxu0 0.0
        %366 = vmatpush1.msra.mxu0 0.0
        %367 = vmatprep.subr.mxu0 0.0
        %368 = vmatpush1.msra.mxu0 0.0
        %369 = vmatprep.subr.mxu0 0.0
        %370 = vmatpush1.msra.mxu0 0.0
        %371 = vmatprep.subr.mxu0 0.0
        %372 = vmatpush1.msra.mxu0 0.0
        %373 = vmatprep.subr.mxu0 0.0
        %374 = vmatpush1.msra.mxu0 0.0
        %375 = vmatprep.subr.mxu0 0.0
        %376 = vmatpush1.msra.mxu0 0.0
        %377 = vmatprep.subr.mxu0 0.0
        %378 = vmatpush1.msra.mxu0 0.0
        %379 = vmatprep.subr.mxu0 0.0
        %380 = vmatpush1.msra.mxu0 0.0
        %381 = vmatprep.subr.mxu0 0.0
        %382 = vmatpush1.msra.mxu0 0.0
        %383 = vmatprep.subr.mxu0 0.0
        %384 = vmatpush1.msra.mxu0 0.0
        %385 = vmatprep.subr.mxu0 0.0
        %386 = vmatpush1.msra.mxu0 0.0
        %387 = vmatprep.subr.mxu0 0.0
        %388 = vmatpush1.msra.mxu0 0.0
        %389 = vmatprep.subr.mxu0 0.0
        %390 = vmatpush1.msra.mxu0 0.0
        %391 = vmatprep.subr.mxu0 0.0
        %392 = vmatpush1.msra.mxu0 0.0
        %393 = vmatprep.subr.mxu0 0.0
        %394 = vmatpush1.msra.mxu0 0.0
        %395 = vmatprep.subr.mxu0 0.0
        %396 = vmatpush1.msra.mxu0 0.0
        %397 = vmatprep.subr.mxu0 0.0
        %398 = vmatpush1.msra.mxu0 0.0
        %399 = vmatprep.subr.mxu0 0.0
        %400 = vmatpush1.msra.mxu0 0.0
        %401 = vmatprep.subr.mxu0 0.0
        %402 = vmatpush1.msra.mxu0 0.0
        %403 = vmatprep.subr.mxu0 0.0
        %404 = vmatpush1.msra.mxu0 0.0
        %405 = vmatprep.subr.mxu0 0.0
        %406 = vmatpush1.msra.mxu0 0.0
        %407 = vmatprep.subr.mxu0 0.0
        %408 = vmatpush1.msra.mxu0 0.0
        %409 = vmatprep.subr.mxu0 0.0
        %410 = vmatpush1.msra.mxu0 0.0
        %411 = vmatprep.subr.mxu0 0.0
        %412 = vmatpush1.msra.mxu0 0.0
        %413 = vmatprep.subr.mxu0 0.0
        %414 = vmatpush1.msra.mxu0 0.0
        %415 = vmatprep.subr.mxu0 0.0
        %416 = vmatpush1.msra.mxu0 0.0
        %417 = vmatprep.subr.mxu0 0.0
        %418 = vmatpush1.msra.mxu0 0.0
        %419 = vmatprep.subr.mxu0 0.0
        %420 = vmatpush1.msra.mxu0 0.0
        %421 = vmatprep.subr.mxu0 0.0
        %422 = vmatpush1.msra.mxu0 0.0
        %423 = vmatprep.mubr.f32.mxu0 0.0
        %424 = vmatmul.mubr.f32.gmra.mrb[0].mxu0 %v352
        %v425 = vpop.f32.mrb[0].mxu0
        %v426 = vadd.f32 0.0, %v425
        %v427 = vpop.f32.mrb[0].mxu0
        %v428 = vadd.f32 0.0, %v427
        %429 = vdwg.mxu0
        %v430 = vld [vmem:[#allocation8] sm:$0xf]
        %v432 = vcombine.high %v346, %v346
        %v434 = vsel %vm350, %v430, 0
        %v436 = vsel %vm354, %v346, 0
        %v438 = vsel %vm354, %v432, 0
        %440 = vmatprep.subr.mxu0 %v438
        %441 = vmatpush1.msra.mxu0 %v436
        %442 = vmatprep.subr.mxu0 0.0
        %443 = vmatpush1.msra.mxu0 0.0
        %444 = vmatprep.subr.mxu0 0.0
        %445 = vmatpush1.msra.mxu0 0.0
        %446 = vmatprep.subr.mxu0 0.0
        %447 = vmatpush1.msra.mxu0 0.0
        %448 = vmatprep.subr.mxu0 0.0
        %449 = vmatpush1.msra.mxu0 0.0
        %450 = vmatprep.subr.mxu0 0.0
        %451 = vmatpush1.msra.mxu0 0.0
        %452 = vmatprep.subr.mxu0 0.0
        %453 = vmatpush1.msra.mxu0 0.0
        %454 = vmatprep.subr.mxu0 0.0
        %455 = vmatpush1.msra.mxu0 0.0
        %456 = vmatprep.subr.mxu0 0.0
        %457 = vmatpush1.msra.mxu0 0.0
        %458 = vmatprep.subr.mxu0 0.0
        %459 = vmatpush1.msra.mxu0 0.0
        %460 = vmatprep.subr.mxu0 0.0
        %461 = vmatpush1.msra.mxu0 0.0
        %462 = vmatprep.subr.mxu0 0.0
        %463 = vmatpush1.msra.mxu0 0.0
        %464 = vmatprep.subr.mxu0 0.0
        %465 = vmatpush1.msra.mxu0 0.0
        %466 = vmatprep.subr.mxu0 0.0
        %467 = vmatpush1.msra.mxu0 0.0
        %468 = vmatprep.subr.mxu0 0.0
        %469 = vmatpush1.msra.mxu0 0.0
        %470 = vmatprep.subr.mxu0 0.0
        %471 = vmatpush1.msra.mxu0 0.0
        %472 = vmatprep.subr.mxu0 0.0
        %473 = vmatpush1.msra.mxu0 0.0
        %474 = vmatprep.subr.mxu0 0.0
        %475 = vmatpush1.msra.mxu0 0.0
        %476 = vmatprep.subr.mxu0 0.0
        %477 = vmatpush1.msra.mxu0 0.0
        %478 = vmatprep.subr.mxu0 0.0
        %479 = vmatpush1.msra.mxu0 0.0
        %480 = vmatprep.subr.mxu0 0.0
        %481 = vmatpush1.msra.mxu0 0.0
        %482 = vmatprep.subr.mxu0 0.0
        %483 = vmatpush1.msra.mxu0 0.0
        %484 = vmatprep.subr.mxu0 0.0
        %485 = vmatpush1.msra.mxu0 0.0
        %486 = vmatprep.subr.mxu0 0.0
        %487 = vmatpush1.msra.mxu0 0.0
        %488 = vmatprep.subr.mxu0 0.0
        %489 = vmatpush1.msra.mxu0 0.0
        %490 = vmatprep.subr.mxu0 0.0
        %491 = vmatpush1.msra.mxu0 0.0
        %492 = vmatprep.subr.mxu0 0.0
        %493 = vmatpush1.msra.mxu0 0.0
        %494 = vmatprep.subr.mxu0 0.0
        %495 = vmatpush1.msra.mxu0 0.0
        %496 = vmatprep.subr.mxu0 0.0
        %497 = vmatpush1.msra.mxu0 0.0
        %498 = vmatprep.subr.mxu0 0.0
        %499 = vmatpush1.msra.mxu0 0.0
        %500 = vmatprep.subr.mxu0 0.0
        %501 = vmatpush1.msra.mxu0 0.0
        %502 = vmatprep.subr.mxu0 0.0
        %503 = vmatpush1.msra.mxu0 0.0
        %504 = vmatprep.mubr.f32.mxu0 0.0
        %505 = vmatmul.mubr.f32.gmra.mrb[0].mxu0 %v434
        %v506 = vpop.f32.mrb[0].mxu0
        %v507 = vadd.f32 0.0, %v506
        %v508 = vpop.f32.mrb[0].mxu0
        %v509 = vadd.f32 0.0, %v508
        %510 = vdwg.mxu0
        %v511 = vld [vmem:[%s343] sm:$0xf]
        %v513 = vsel %vm350, %v511, 0
        %515 = vmatprep.subr.mxu0 %v438
        %516 = vmatpush1.msra.mxu0 %v436
        %517 = vmatprep.subr.mxu0 0.0
        %518 = vmatpush1.msra.mxu0 0.0
        %519 = vmatprep.subr.mxu0 0.0
        %520 = vmatpush1.msra.mxu0 0.0
        %521 = vmatprep.subr.mxu0 0.0
        %522 = vmatpush1.msra.mxu0 0.0
        %523 = vmatprep.subr.mxu0 0.0
        %524 = vmatpush1.msra.mxu0 0.0
        %525 = vmatprep.subr.mxu0 0.0
        %526 = vmatpush1.msra.mxu0 0.0
        %527 = vmatprep.subr.mxu0 0.0
        %528 = vmatpush1.msra.mxu0 0.0
        %529 = vmatprep.subr.mxu0 0.0
        %530 = vmatpush1.msra.mxu0 0.0
        %531 = vmatprep.subr.mxu0 0.0
        %532 = vmatpush1.msra.mxu0 0.0
        %533 = vmatprep.subr.mxu0 0.0
        %534 = vmatpush1.msra.mxu0 0.0
        %535 = vmatprep.subr.mxu0 0.0
        %536 = vmatpush1.msra.mxu0 0.0
        %537 = vmatprep.subr.mxu0 0.0
        %538 = vmatpush1.msra.mxu0 0.0
        %539 = vmatprep.subr.mxu0 0.0
        %540 = vmatpush1.msra.mxu0 0.0
        %541 = vmatprep.subr.mxu0 0.0
        %542 = vmatpush1.msra.mxu0 0.0
        %543 = vmatprep.subr.mxu0 0.0
        %544 = vmatpush1.msra.mxu0 0.0
        %545 = vmatprep.subr.mxu0 0.0
        %546 = vmatpush1.msra.mxu0 0.0
        %547 = vmatprep.subr.mxu0 0.0
        %548 = vmatpush1.msra.mxu0 0.0
        %549 = vmatprep.subr.mxu0 0.0
        %550 = vmatpush1.msra.mxu0 0.0
        %551 = vmatprep.subr.mxu0 0.0
        %552 = vmatpush1.msra.mxu0 0.0
        %553 = vmatprep.subr.mxu0 0.0
        %554 = vmatpush1.msra.mxu0 0.0
        %555 = vmatprep.subr.mxu0 0.0
        %556 = vmatpush1.msra.mxu0 0.0
        %557 = vmatprep.subr.mxu0 0.0
        %558 = vmatpush1.msra.mxu0 0.0
        %559 = vmatprep.subr.mxu0 0.0
        %560 = vmatpush1.msra.mxu0 0.0
        %561 = vmatprep.subr.mxu0 0.0
        %562 = vmatpush1.msra.mxu0 0.0
        %563 = vmatprep.subr.mxu0 0.0
        %564 = vmatpush1.msra.mxu0 0.0
        %565 = vmatprep.subr.mxu0 0.0
        %566 = vmatpush1.msra.mxu0 0.0
        %567 = vmatprep.subr.mxu0 0.0
        %568 = vmatpush1.msra.mxu0 0.0
        %569 = vmatprep.subr.mxu0 0.0
        %570 = vmatpush1.msra.mxu0 0.0
        %571 = vmatprep.subr.mxu0 0.0
        %572 = vmatpush1.msra.mxu0 0.0
        %573 = vmatprep.subr.mxu0 0.0
        %574 = vmatpush1.msra.mxu0 0.0
        %575 = vmatprep.subr.mxu0 0.0
        %576 = vmatpush1.msra.mxu0 0.0
        %577 = vmatprep.subr.mxu0 0.0
        %578 = vmatpush1.msra.mxu0 0.0
        %579 = vmatprep.mubr.f32.mxu0 0.0
        %580 = vmatmul.mubr.f32.gmra.mrb[0].mxu0 %v513
        %v581 = vpop.f32.mrb[0].mxu0
        %v582 = vadd.f32 0.0, %v581
        %v583 = vpop.f32.mrb[0].mxu0
        %v584 = vadd.f32 0.0, %v583
        %585 = vdwg.mxu0
        %v588 = vunpack.c.l.s4 1966171168
        %v589 = vunpack.c.0.s8 %v588
        %v590 = vlaneseq
        %v591 = vshrl.u32 %v590, 7
        %v592 = vsub.s32 %v589, %v591
        %v593 = vrot.slane %v426, %v592
        %v594 = vcombine.high %v593, %v593
        %v596 = vunpack.c.l.s4 1966171168
        %v597 = vunpack.c.0.s8 %v596
        %v598 = vlaneseq
        %v599 = vshrl.u32 %v598, 7
        %v600 = vsub.s32 %v597, %v599
        %v601 = vrot.slane %v593, %v600
        %v603 = vunpack.c.l.s4 1966171168
        %v604 = vunpack.c.0.s8 %v603
        %v605 = vlaneseq
        %v606 = vshrl.u32 %v605, 7
        %v607 = vsub.s32 %v604, %v606
        %v608 = vrot.slane %v594, %v607
        %v609 = vcombine.high %v601, %v601
        %v610 = vcombine.high %v608, %v608
        %vm615 = vcmask 122880
        %616 = vst.msk [vmem:[#allocation2] sm:$0x1] %vm615, %v601
        %617 = vst.msk [vmem:[#allocation2 + $0x10] sm:$0x1] %vm615, %v608
        %618 = vst.msk [vmem:[#allocation2 + $0x20] sm:$0x1] %vm615, %v609
        %619 = vst.msk [vmem:[#allocation2 + $0x30] sm:$0x1] %vm615, %v610
        %v622 = vunpack.c.l.s4 1966171168
        %v623 = vunpack.c.0.s8 %v622
        %v624 = vlaneseq
        %v625 = vshrl.u32 %v624, 7
        %v626 = vsub.s32 %v623, %v625
        %v627 = vrot.slane %v507, %v626
        %v628 = vcombine.high %v627, %v627
        %v630 = vunpack.c.l.s4 1966171168
        %v631 = vunpack.c.0.s8 %v630
        %v632 = vlaneseq
        %v633 = vshrl.u32 %v632, 7
        %v634 = vsub.s32 %v631, %v633
        %v635 = vrot.slane %v627, %v634
        %v637 = vunpack.c.l.s4 1966171168
        %v638 = vunpack.c.0.s8 %v637
        %v639 = vlaneseq
        %v640 = vshrl.u32 %v639, 7
        %v641 = vsub.s32 %v638, %v640
        %v642 = vrot.slane %v628, %v641
        %v643 = vcombine.high %v635, %v635
        %v644 = vcombine.high %v642, %v642
        %649 = vst.msk [vmem:[#allocation3] sm:$0x1] %vm615, %v635
        %650 = vst.msk [vmem:[#allocation3 + $0x10] sm:$0x1] %vm615, %v642
        %651 = vst.msk [vmem:[#allocation3 + $0x20] sm:$0x1] %vm615, %v643
        %652 = vst.msk [vmem:[#allocation3 + $0x30] sm:$0x1] %vm615, %v644
        %v655 = vunpack.c.l.s4 1966171168
        %v656 = vunpack.c.0.s8 %v655
        %v657 = vlaneseq
        %v658 = vshrl.u32 %v657, 7
        %v659 = vsub.s32 %v656, %v658
        %v660 = vrot.slane %v582, %v659
        %v661 = vcombine.high %v660, %v660
        %v663 = vunpack.c.l.s4 1966171168
        %v664 = vunpack.c.0.s8 %v663
        %v665 = vlaneseq
        %v666 = vshrl.u32 %v665, 7
        %v667 = vsub.s32 %v664, %v666
        %v668 = vrot.slane %v660, %v667
        %v670 = vunpack.c.l.s4 1966171168
        %v671 = vunpack.c.0.s8 %v670
        %v672 = vlaneseq
        %v673 = vshrl.u32 %v672, 7
        %v674 = vsub.s32 %v671, %v673
        %v675 = vrot.slane %v661, %v674
        %v676 = vcombine.high %v668, %v668
        %v677 = vcombine.high %v675, %v675
        %682 = vst.msk [vmem:[#allocation4] sm:$0x1] %vm615, %v668
        %683 = vst.msk [vmem:[#allocation4 + $0x10] sm:$0x1] %vm615, %v675
        %684 = vst.msk [vmem:[#allocation4 + $0x20] sm:$0x1] %vm615, %v676
        %685 = vst.msk [vmem:[#allocation4 + $0x30] sm:$0x1] %vm615, %v677
        %v686 = vlaneseq
        %v687 = vshrl.u32 %v686, 7
        %v688 = vsub.s32 0, %v687
        %v689 = vrot.slane %v601, %v688
        %v690 = vlaneseq
        %v691 = vshrl.u32 %v690, 7
        %v692 = vsub.s32 0, %v691
        %v693 = vrot.slane %v608, %v692
        %v694 = vlaneseq
        %v695 = vshrl.u32 %v694, 7
        %v696 = vsub.s32 0, %v695
        %v697 = vrot.slane %v609, %v696
        %v698 = vlaneseq
        %v699 = vshrl.u32 %v698, 7
        %v700 = vsub.s32 0, %v699
        %v701 = vrot.slane %v610, %v700
        %702 = vrot.lane.b32.xlu0 %v689, 112
        %v703 = vpop.permute.xlu0 %702
        %704 = vrot.lane.b32.xlu0 %v693, 112
        %v705 = vpop.permute.xlu0 %704
        %706 = vrot.lane.b32.xlu0 %v697, 112
        %v707 = vpop.permute.xlu0 %706
        %708 = vrot.lane.b32.xlu0 %v701, 112
        %v709 = vpop.permute.xlu0 %708
        %714 = vst.msk [vmem:[#allocation2 + $0x1] sm:$0x1] %vm615, %v703
        %715 = vst.msk [vmem:[#allocation2 + $0x11] sm:$0x1] %vm615, %v705
        %716 = vst.msk [vmem:[#allocation2 + $0x21] sm:$0x1] %vm615, %v707
        %717 = vst.msk [vmem:[#allocation2 + $0x31] sm:$0x1] %vm615, %v709
        %v718 = vlaneseq
        %v719 = vshrl.u32 %v718, 7
        %v720 = vsub.s32 0, %v719
        %v721 = vrot.slane %v635, %v720
        %v722 = vlaneseq
        %v723 = vshrl.u32 %v722, 7
        %v724 = vsub.s32 0, %v723
        %v725 = vrot.slane %v642, %v724
        %v726 = vlaneseq
        %v727 = vshrl.u32 %v726, 7
        %v728 = vsub.s32 0, %v727
        %v729 = vrot.slane %v643, %v728
        %v730 = vlaneseq
        %v731 = vshrl.u32 %v730, 7
        %v732 = vsub.s32 0, %v731
        %v733 = vrot.slane %v644, %v732
        %734 = vrot.lane.b32.xlu0 %v721, 112
        %v735 = vpop.permute.xlu0 %734
        %736 = vrot.lane.b32.xlu0 %v725, 112
        %v737 = vpop.permute.xlu0 %736
        %738 = vrot.lane.b32.xlu0 %v729, 112
        %v739 = vpop.permute.xlu0 %738
        %740 = vrot.lane.b32.xlu0 %v733, 112
        %v741 = vpop.permute.xlu0 %740
        %746 = vst.msk [vmem:[#allocation3 + $0x1] sm:$0x1] %vm615, %v735
        %747 = vst.msk [vmem:[#allocation3 + $0x11] sm:$0x1] %vm615, %v737
        %748 = vst.msk [vmem:[#allocation3 + $0x21] sm:$0x1] %vm615, %v739
        %749 = vst.msk [vmem:[#allocation3 + $0x31] sm:$0x1] %vm615, %v741
        %v750 = vlaneseq
        %v751 = vshrl.u32 %v750, 7
        %v752 = vsub.s32 0, %v751
        %v753 = vrot.slane %v668, %v752
        %v754 = vlaneseq
        %v755 = vshrl.u32 %v754, 7
        %v756 = vsub.s32 0, %v755
        %v757 = vrot.slane %v675, %v756
        %v758 = vlaneseq
        %v759 = vshrl.u32 %v758, 7
        %v760 = vsub.s32 0, %v759
        %v761 = vrot.slane %v676, %v760
        %v762 = vlaneseq
        %v763 = vshrl.u32 %v762, 7
        %v764 = vsub.s32 0, %v763
        %v765 = vrot.slane %v677, %v764
        %766 = vrot.lane.b32.xlu0 %v753, 112
        %v767 = vpop.permute.xlu0 %766
        %768 = vrot.lane.b32.xlu0 %v757, 112
        %v769 = vpop.permute.xlu0 %768
        %770 = vrot.lane.b32.xlu0 %v761, 112
        %v771 = vpop.permute.xlu0 %770
        %772 = vrot.lane.b32.xlu0 %v765, 112
        %v773 = vpop.permute.xlu0 %772
        %778 = vst.msk [vmem:[#allocation4 + $0x1] sm:$0x1] %vm615, %v767
        %779 = vst.msk [vmem:[#allocation4 + $0x11] sm:$0x1] %vm615, %v769
        %780 = vst.msk [vmem:[#allocation4 + $0x21] sm:$0x1] %vm615, %v771
        %781 = vst.msk [vmem:[#allocation4 + $0x31] sm:$0x1] %vm615, %v773
        %782 = vrot.lane.b32.xlu0 %v689, 96
        %v783 = vpop.permute.xlu0 %782
        %784 = vrot.lane.b32.xlu0 %v693, 96
        %v785 = vpop.permute.xlu0 %784
        %786 = vrot.lane.b32.xlu0 %v697, 96
        %v787 = vpop.permute.xlu0 %786
        %788 = vrot.lane.b32.xlu0 %v701, 96
        %v789 = vpop.permute.xlu0 %788
        %794 = vst.msk [vmem:[#allocation2 + $0x2] sm:$0x1] %vm615, %v783
        %795 = vst.msk [vmem:[#allocation2 + $0x12] sm:$0x1] %vm615, %v785
        %796 = vst.msk [vmem:[#allocation2 + $0x22] sm:$0x1] %vm615, %v787
        %797 = vst.msk [vmem:[#allocation2 + $0x32] sm:$0x1] %vm615, %v789
        %798 = vrot.lane.b32.xlu0 %v721, 96
        %v799 = vpop.permute.xlu0 %798
        %800 = vrot.lane.b32.xlu0 %v725, 96
        %v801 = vpop.permute.xlu0 %800
        %802 = vrot.lane.b32.xlu0 %v729, 96
        %v803 = vpop.permute.xlu0 %802
        %804 = vrot.lane.b32.xlu0 %v733, 96
        %v805 = vpop.permute.xlu0 %804
        %810 = vst.msk [vmem:[#allocation3 + $0x2] sm:$0x1] %vm615, %v799
        %811 = vst.msk [vmem:[#allocation3 + $0x12] sm:$0x1] %vm615, %v801
        %812 = vst.msk [vmem:[#allocation3 + $0x22] sm:$0x1] %vm615, %v803
        %813 = vst.msk [vmem:[#allocation3 + $0x32] sm:$0x1] %vm615, %v805
        %814 = vrot.lane.b32.xlu0 %v753, 96
        %v815 = vpop.permute.xlu0 %814
        %816 = vrot.lane.b32.xlu0 %v757, 96
        %v817 = vpop.permute.xlu0 %816
        %818 = vrot.lane.b32.xlu0 %v761, 96
        %v819 = vpop.permute.xlu0 %818
        %820 = vrot.lane.b32.xlu0 %v765, 96
        %v821 = vpop.permute.xlu0 %820
        %826 = vst.msk [vmem:[#allocation4 + $0x2] sm:$0x1] %vm615, %v815
        %827 = vst.msk [vmem:[#allocation4 + $0x12] sm:$0x1] %vm615, %v817
        %828 = vst.msk [vmem:[#allocation4 + $0x22] sm:$0x1] %vm615, %v819
        %829 = vst.msk [vmem:[#allocation4 + $0x32] sm:$0x1] %vm615, %v821
        %830 = vrot.lane.b32.xlu0 %v689, 80
        %v831 = vpop.permute.xlu0 %830
        %832 = vrot.lane.b32.xlu0 %v693, 80
        %v833 = vpop.permute.xlu0 %832
        %834 = vrot.lane.b32.xlu0 %v697, 80
        %v835 = vpop.permute.xlu0 %834
        %836 = vrot.lane.b32.xlu0 %v701, 80
        %v837 = vpop.permute.xlu0 %836
        %842 = vst.msk [vmem:[#allocation2 + $0x3] sm:$0x1] %vm615, %v831
        %843 = vst.msk [vmem:[#allocation2 + $0x13] sm:$0x1] %vm615, %v833
        %844 = vst.msk [vmem:[#allocation2 + $0x23] sm:$0x1] %vm615, %v835
        %845 = vst.msk [vmem:[#allocation2 + $0x33] sm:$0x1] %vm615, %v837
        %846 = vrot.lane.b32.xlu0 %v721, 80
        %v847 = vpop.permute.xlu0 %846
        %848 = vrot.lane.b32.xlu0 %v725, 80
        %v849 = vpop.permute.xlu0 %848
        %850 = vrot.lane.b32.xlu0 %v729, 80
        %v851 = vpop.permute.xlu0 %850
        %852 = vrot.lane.b32.xlu0 %v733, 80
        %v853 = vpop.permute.xlu0 %852
        %858 = vst.msk [vmem:[#allocation3 + $0x3] sm:$0x1] %vm615, %v847
        %859 = vst.msk [vmem:[#allocation3 + $0x13] sm:$0x1] %vm615, %v849
        %860 = vst.msk [vmem:[#allocation3 + $0x23] sm:$0x1] %vm615, %v851
        %861 = vst.msk [vmem:[#allocation3 + $0x33] sm:$0x1] %vm615, %v853
        %862 = vrot.lane.b32.xlu0 %v753, 80
        %v863 = vpop.permute.xlu0 %862
        %864 = vrot.lane.b32.xlu0 %v757, 80
        %v865 = vpop.permute.xlu0 %864
        %866 = vrot.lane.b32.xlu0 %v761, 80
        %v867 = vpop.permute.xlu0 %866
        %868 = vrot.lane.b32.xlu0 %v765, 80
        %v869 = vpop.permute.xlu0 %868
        %874 = vst.msk [vmem:[#allocation4 + $0x3] sm:$0x1] %vm615, %v863
        %875 = vst.msk [vmem:[#allocation4 + $0x13] sm:$0x1] %vm615, %v865
        %876 = vst.msk [vmem:[#allocation4 + $0x23] sm:$0x1] %vm615, %v867
        %877 = vst.msk [vmem:[#allocation4 + $0x33] sm:$0x1] %vm615, %v869
        %878 = vrot.lane.b32.xlu0 %v689, 64
        %v879 = vpop.permute.xlu0 %878
        %880 = vrot.lane.b32.xlu0 %v693, 64
        %v881 = vpop.permute.xlu0 %880
        %882 = vrot.lane.b32.xlu0 %v697, 64
        %v883 = vpop.permute.xlu0 %882
        %884 = vrot.lane.b32.xlu0 %v701, 64
        %v885 = vpop.permute.xlu0 %884
        %890 = vst.msk [vmem:[#allocation2 + $0x4] sm:$0x1] %vm615, %v879
        %891 = vst.msk [vmem:[#allocation2 + $0x14] sm:$0x1] %vm615, %v881
        %892 = vst.msk [vmem:[#allocation2 + $0x24] sm:$0x1] %vm615, %v883
        %893 = vst.msk [vmem:[#allocation2 + $0x34] sm:$0x1] %vm615, %v885
        %894 = vrot.lane.b32.xlu0 %v721, 64
        %v895 = vpop.permute.xlu0 %894
        %896 = vrot.lane.b32.xlu0 %v725, 64
        %v897 = vpop.permute.xlu0 %896
        %898 = vrot.lane.b32.xlu0 %v729, 64
        %v899 = vpop.permute.xlu0 %898
        %900 = vrot.lane.b32.xlu0 %v733, 64
        %v901 = vpop.permute.xlu0 %900
        %906 = vst.msk [vmem:[#allocation3 + $0x4] sm:$0x1] %vm615, %v895
        %907 = vst.msk [vmem:[#allocation3 + $0x14] sm:$0x1] %vm615, %v897
        %908 = vst.msk [vmem:[#allocation3 + $0x24] sm:$0x1] %vm615, %v899
        %909 = vst.msk [vmem:[#allocation3 + $0x34] sm:$0x1] %vm615, %v901
        %910 = vrot.lane.b32.xlu0 %v753, 64
        %v911 = vpop.permute.xlu0 %910
        %912 = vrot.lane.b32.xlu0 %v757, 64
        %v913 = vpop.permute.xlu0 %912
        %914 = vrot.lane.b32.xlu0 %v761, 64
        %v915 = vpop.permute.xlu0 %914
        %916 = vrot.lane.b32.xlu0 %v765, 64
        %v917 = vpop.permute.xlu0 %916
        %922 = vst.msk [vmem:[#allocation4 + $0x4] sm:$0x1] %vm615, %v911
        %923 = vst.msk [vmem:[#allocation4 + $0x14] sm:$0x1] %vm615, %v913
        %924 = vst.msk [vmem:[#allocation4 + $0x24] sm:$0x1] %vm615, %v915
        %925 = vst.msk [vmem:[#allocation4 + $0x34] sm:$0x1] %vm615, %v917
        %926 = vrot.lane.b32.xlu0 %v689, 48
        %v927 = vpop.permute.xlu0 %926
        %928 = vrot.lane.b32.xlu0 %v693, 48
        %v929 = vpop.permute.xlu0 %928
        %930 = vrot.lane.b32.xlu0 %v697, 48
        %v931 = vpop.permute.xlu0 %930
        %932 = vrot.lane.b32.xlu0 %v701, 48
        %v933 = vpop.permute.xlu0 %932
        %938 = vst.msk [vmem:[#allocation2 + $0x5] sm:$0x1] %vm615, %v927
        %939 = vst.msk [vmem:[#allocation2 + $0x15] sm:$0x1] %vm615, %v929
        %940 = vst.msk [vmem:[#allocation2 + $0x25] sm:$0x1] %vm615, %v931
        %941 = vst.msk [vmem:[#allocation2 + $0x35] sm:$0x1] %vm615, %v933
        %942 = vrot.lane.b32.xlu0 %v721, 48
        %v943 = vpop.permute.xlu0 %942
        %944 = vrot.lane.b32.xlu0 %v725, 48
        %v945 = vpop.permute.xlu0 %944
        %946 = vrot.lane.b32.xlu0 %v729, 48
        %v947 = vpop.permute.xlu0 %946
        %948 = vrot.lane.b32.xlu0 %v733, 48
        %v949 = vpop.permute.xlu0 %948
        %954 = vst.msk [vmem:[#allocation3 + $0x5] sm:$0x1] %vm615, %v943
        %955 = vst.msk [vmem:[#allocation3 + $0x15] sm:$0x1] %vm615, %v945
        %956 = vst.msk [vmem:[#allocation3 + $0x25] sm:$0x1] %vm615, %v947
        %957 = vst.msk [vmem:[#allocation3 + $0x35] sm:$0x1] %vm615, %v949
        %958 = vrot.lane.b32.xlu0 %v753, 48
        %v959 = vpop.permute.xlu0 %958
        %960 = vrot.lane.b32.xlu0 %v757, 48
        %v961 = vpop.permute.xlu0 %960
        %962 = vrot.lane.b32.xlu0 %v761, 48
        %v963 = vpop.permute.xlu0 %962
        %964 = vrot.lane.b32.xlu0 %v765, 48
        %v965 = vpop.permute.xlu0 %964
        %970 = vst.msk [vmem:[#allocation4 + $0x5] sm:$0x1] %vm615, %v959
        %971 = vst.msk [vmem:[#allocation4 + $0x15] sm:$0x1] %vm615, %v961
        %972 = vst.msk [vmem:[#allocation4 + $0x25] sm:$0x1] %vm615, %v963
        %973 = vst.msk [vmem:[#allocation4 + $0x35] sm:$0x1] %vm615, %v965
        %974 = vrot.lane.b32.xlu0 %v689, 32
        %v975 = vpop.permute.xlu0 %974
        %976 = vrot.lane.b32.xlu0 %v693, 32
        %v977 = vpop.permute.xlu0 %976
        %978 = vrot.lane.b32.xlu0 %v697, 32
        %v979 = vpop.permute.xlu0 %978
        %980 = vrot.lane.b32.xlu0 %v701, 32
        %v981 = vpop.permute.xlu0 %980
        %986 = vst.msk [vmem:[#allocation2 + $0x6] sm:$0x1] %vm615, %v975
        %987 = vst.msk [vmem:[#allocation2 + $0x16] sm:$0x1] %vm615, %v977
        %988 = vst.msk [vmem:[#allocation2 + $0x26] sm:$0x1] %vm615, %v979
        %989 = vst.msk [vmem:[#allocation2 + $0x36] sm:$0x1] %vm615, %v981
        %990 = vrot.lane.b32.xlu0 %v721, 32
        %v991 = vpop.permute.xlu0 %990
        %992 = vrot.lane.b32.xlu0 %v725, 32
        %v993 = vpop.permute.xlu0 %992
        %994 = vrot.lane.b32.xlu0 %v729, 32
        %v995 = vpop.permute.xlu0 %994
        %996 = vrot.lane.b32.xlu0 %v733, 32
        %v997 = vpop.permute.xlu0 %996
        %1002 = vst.msk [vmem:[#allocation3 + $0x6] sm:$0x1] %vm615, %v991
        %1003 = vst.msk [vmem:[#allocation3 + $0x16] sm:$0x1] %vm615, %v993
        %1004 = vst.msk [vmem:[#allocation3 + $0x26] sm:$0x1] %vm615, %v995
        %1005 = vst.msk [vmem:[#allocation3 + $0x36] sm:$0x1] %vm615, %v997
        %1006 = vrot.lane.b32.xlu0 %v753, 32
        %v1007 = vpop.permute.xlu0 %1006
        %1008 = vrot.lane.b32.xlu0 %v757, 32
        %v1009 = vpop.permute.xlu0 %1008
        %1010 = vrot.lane.b32.xlu0 %v761, 32
        %v1011 = vpop.permute.xlu0 %1010
        %1012 = vrot.lane.b32.xlu0 %v765, 32
        %v1013 = vpop.permute.xlu0 %1012
        %1018 = vst.msk [vmem:[#allocation4 + $0x6] sm:$0x1] %vm615, %v1007
        %1019 = vst.msk [vmem:[#allocation4 + $0x16] sm:$0x1] %vm615, %v1009
        %1020 = vst.msk [vmem:[#allocation4 + $0x26] sm:$0x1] %vm615, %v1011
        %1021 = vst.msk [vmem:[#allocation4 + $0x36] sm:$0x1] %vm615, %v1013
        %1022 = vrot.lane.b32.xlu0 %v689, 16
        %v1023 = vpop.permute.xlu0 %1022
        %1024 = vrot.lane.b32.xlu0 %v693, 16
        %v1025 = vpop.permute.xlu0 %1024
        %1026 = vrot.lane.b32.xlu0 %v697, 16
        %v1027 = vpop.permute.xlu0 %1026
        %1028 = vrot.lane.b32.xlu0 %v701, 16
        %v1029 = vpop.permute.xlu0 %1028
        %1034 = vst.msk [vmem:[#allocation2 + $0x7] sm:$0x1] %vm615, %v1023
        %1035 = vst.msk [vmem:[#allocation2 + $0x17] sm:$0x1] %vm615, %v1025
        %1036 = vst.msk [vmem:[#allocation2 + $0x27] sm:$0x1] %vm615, %v1027
        %1037 = vst.msk [vmem:[#allocation2 + $0x37] sm:$0x1] %vm615, %v1029
        %1038 = vrot.lane.b32.xlu0 %v721, 16
        %v1039 = vpop.permute.xlu0 %1038
        %1040 = vrot.lane.b32.xlu0 %v725, 16
        %v1041 = vpop.permute.xlu0 %1040
        %1042 = vrot.lane.b32.xlu0 %v729, 16
        %v1043 = vpop.permute.xlu0 %1042
        %1044 = vrot.lane.b32.xlu0 %v733, 16
        %v1045 = vpop.permute.xlu0 %1044
        %1050 = vst.msk [vmem:[#allocation3 + $0x7] sm:$0x1] %vm615, %v1039
        %1051 = vst.msk [vmem:[#allocation3 + $0x17] sm:$0x1] %vm615, %v1041
        %1052 = vst.msk [vmem:[#allocation3 + $0x27] sm:$0x1] %vm615, %v1043
        %1053 = vst.msk [vmem:[#allocation3 + $0x37] sm:$0x1] %vm615, %v1045
        %1054 = vrot.lane.b32.xlu0 %v753, 16
        %v1055 = vpop.permute.xlu0 %1054
        %1056 = vrot.lane.b32.xlu0 %v757, 16
        %v1057 = vpop.permute.xlu0 %1056
        %1058 = vrot.lane.b32.xlu0 %v761, 16
        %v1059 = vpop.permute.xlu0 %1058
        %1060 = vrot.lane.b32.xlu0 %v765, 16
        %v1061 = vpop.permute.xlu0 %1060
        %1066 = vst.msk [vmem:[#allocation4 + $0x7] sm:$0x1] %vm615, %v1055
        %1067 = vst.msk [vmem:[#allocation4 + $0x17] sm:$0x1] %vm615, %v1057
        %1068 = vst.msk [vmem:[#allocation4 + $0x27] sm:$0x1] %vm615, %v1059
        %1069 = vst.msk [vmem:[#allocation4 + $0x37] sm:$0x1] %vm615, %v1061
        %v1072 = vunpack.c.l.s4 1966171168
        %v1073 = vunpack.c.0.s8 %v1072
        %v1074 = vlaneseq
        %v1075 = vshrl.u32 %v1074, 7
        %v1076 = vsub.s32 %v1073, %v1075
        %v1077 = vrot.slane %v428, %v1076
        %v1078 = vcombine.high %v1077, %v1077
        %v1080 = vunpack.c.l.s4 1966171168
        %v1081 = vunpack.c.0.s8 %v1080
        %v1082 = vlaneseq
        %v1083 = vshrl.u32 %v1082, 7
        %v1084 = vsub.s32 %v1081, %v1083
        %v1085 = vrot.slane %v1077, %v1084
        %v1087 = vunpack.c.l.s4 1966171168
        %v1088 = vunpack.c.0.s8 %v1087
        %v1089 = vlaneseq
        %v1090 = vshrl.u32 %v1089, 7
        %v1091 = vsub.s32 %v1088, %v1090
        %v1092 = vrot.slane %v1078, %v1091
        %v1093 = vcombine.high %v1085, %v1085
        %v1094 = vcombine.high %v1092, %v1092
        %1099 = vst.msk [vmem:[#allocation2 + $0x8] sm:$0x1] %vm615, %v1085
        %1100 = vst.msk [vmem:[#allocation2 + $0x18] sm:$0x1] %vm615, %v1092
        %1101 = vst.msk [vmem:[#allocation2 + $0x28] sm:$0x1] %vm615, %v1093
        %1102 = vst.msk [vmem:[#allocation2 + $0x38] sm:$0x1] %vm615, %v1094
        %v1105 = vunpack.c.l.s4 1966171168
        %v1106 = vunpack.c.0.s8 %v1105
        %v1107 = vlaneseq
        %v1108 = vshrl.u32 %v1107, 7
        %v1109 = vsub.s32 %v1106, %v1108
        %v1110 = vrot.slane %v509, %v1109
        %v1111 = vcombine.high %v1110, %v1110
        %v1113 = vunpack.c.l.s4 1966171168
        %v1114 = vunpack.c.0.s8 %v1113
        %v1115 = vlaneseq
        %v1116 = vshrl.u32 %v1115, 7
        %v1117 = vsub.s32 %v1114, %v1116
        %v1118 = vrot.slane %v1110, %v1117
        %v1120 = vunpack.c.l.s4 1966171168
        %v1121 = vunpack.c.0.s8 %v1120
        %v1122 = vlaneseq
        %v1123 = vshrl.u32 %v1122, 7
        %v1124 = vsub.s32 %v1121, %v1123
        %v1125 = vrot.slane %v1111, %v1124
        %v1126 = vcombine.high %v1118, %v1118
        %v1127 = vcombine.high %v1125, %v1125
        %1132 = vst.msk [vmem:[#allocation3 + $0x8] sm:$0x1] %vm615, %v1118
        %1133 = vst.msk [vmem:[#allocation3 + $0x18] sm:$0x1] %vm615, %v1125
        %1134 = vst.msk [vmem:[#allocation3 + $0x28] sm:$0x1] %vm615, %v1126
        %1135 = vst.msk [vmem:[#allocation3 + $0x38] sm:$0x1] %vm615, %v1127
        %v1138 = vunpack.c.l.s4 1966171168
        %v1139 = vunpack.c.0.s8 %v1138
        %v1140 = vlaneseq
        %v1141 = vshrl.u32 %v1140, 7
        %v1142 = vsub.s32 %v1139, %v1141
        %v1143 = vrot.slane %v584, %v1142
        %v1144 = vcombine.high %v1143, %v1143
        %v1146 = vunpack.c.l.s4 1966171168
        %v1147 = vunpack.c.0.s8 %v1146
        %v1148 = vlaneseq
        %v1149 = vshrl.u32 %v1148, 7
        %v1150 = vsub.s32 %v1147, %v1149
        %v1151 = vrot.slane %v1143, %v1150
        %v1153 = vunpack.c.l.s4 1966171168
        %v1154 = vunpack.c.0.s8 %v1153
        %v1155 = vlaneseq
        %v1156 = vshrl.u32 %v1155, 7
        %v1157 = vsub.s32 %v1154, %v1156
        %v1158 = vrot.slane %v1144, %v1157
        %v1159 = vcombine.high %v1151, %v1151
        %v1160 = vcombine.high %v1158, %v1158
        %1165 = vst.msk [vmem:[#allocation4 + $0x8] sm:$0x1] %vm615, %v1151
        %1166 = vst.msk [vmem:[#allocation4 + $0x18] sm:$0x1] %vm615, %v1158
        %1167 = vst.msk [vmem:[#allocation4 + $0x28] sm:$0x1] %vm615, %v1159
        %1168 = vst.msk [vmem:[#allocation4 + $0x38] sm:$0x1] %vm615, %v1160
        %v1169 = vlaneseq
        %v1170 = vshrl.u32 %v1169, 7
        %v1171 = vsub.s32 0, %v1170
        %v1172 = vrot.slane %v1085, %v1171
        %v1173 = vlaneseq
        %v1174 = vshrl.u32 %v1173, 7
        %v1175 = vsub.s32 0, %v1174
        %v1176 = vrot.slane %v1092, %v1175
        %v1177 = vlaneseq
        %v1178 = vshrl.u32 %v1177, 7
        %v1179 = vsub.s32 0, %v1178
        %v1180 = vrot.slane %v1093, %v1179
        %v1181 = vlaneseq
        %v1182 = vshrl.u32 %v1181, 7
        %v1183 = vsub.s32 0, %v1182
        %v1184 = vrot.slane %v1094, %v1183
        %1185 = vrot.lane.b32.xlu0 %v1172, 112
        %v1186 = vpop.permute.xlu0 %1185
        %1187 = vrot.lane.b32.xlu0 %v1176, 112
        %v1188 = vpop.permute.xlu0 %1187
        %1189 = vrot.lane.b32.xlu0 %v1180, 112
        %v1190 = vpop.permute.xlu0 %1189
        %1191 = vrot.lane.b32.xlu0 %v1184, 112
        %v1192 = vpop.permute.xlu0 %1191
        %1197 = vst.msk [vmem:[#allocation2 + $0x9] sm:$0x1] %vm615, %v1186
        %1198 = vst.msk [vmem:[#allocation2 + $0x19] sm:$0x1] %vm615, %v1188
        %1199 = vst.msk [vmem:[#allocation2 + $0x29] sm:$0x1] %vm615, %v1190
        %1200 = vst.msk [vmem:[#allocation2 + $0x39] sm:$0x1] %vm615, %v1192
        %v1201 = vlaneseq
        %v1202 = vshrl.u32 %v1201, 7
        %v1203 = vsub.s32 0, %v1202
        %v1204 = vrot.slane %v1118, %v1203
        %v1205 = vlaneseq
        %v1206 = vshrl.u32 %v1205, 7
        %v1207 = vsub.s32 0, %v1206
        %v1208 = vrot.slane %v1125, %v1207
        %v1209 = vlaneseq
        %v1210 = vshrl.u32 %v1209, 7
        %v1211 = vsub.s32 0, %v1210
        %v1212 = vrot.slane %v1126, %v1211
        %v1213 = vlaneseq
        %v1214 = vshrl.u32 %v1213, 7
        %v1215 = vsub.s32 0, %v1214
        %v1216 = vrot.slane %v1127, %v1215
        %1217 = vrot.lane.b32.xlu0 %v1204, 112
        %v1218 = vpop.permute.xlu0 %1217
        %1219 = vrot.lane.b32.xlu0 %v1208, 112
        %v1220 = vpop.permute.xlu0 %1219
        %1221 = vrot.lane.b32.xlu0 %v1212, 112
        %v1222 = vpop.permute.xlu0 %1221
        %1223 = vrot.lane.b32.xlu0 %v1216, 112
        %v1224 = vpop.permute.xlu0 %1223
        %1229 = vst.msk [vmem:[#allocation3 + $0x9] sm:$0x1] %vm615, %v1218
        %1230 = vst.msk [vmem:[#allocation3 + $0x19] sm:$0x1] %vm615, %v1220
        %1231 = vst.msk [vmem:[#allocation3 + $0x29] sm:$0x1] %vm615, %v1222
        %1232 = vst.msk [vmem:[#allocation3 + $0x39] sm:$0x1] %vm615, %v1224
        %v1233 = vlaneseq
        %v1234 = vshrl.u32 %v1233, 7
        %v1235 = vsub.s32 0, %v1234
        %v1236 = vrot.slane %v1151, %v1235
        %v1237 = vlaneseq
        %v1238 = vshrl.u32 %v1237, 7
        %v1239 = vsub.s32 0, %v1238
        %v1240 = vrot.slane %v1158, %v1239
        %v1241 = vlaneseq
        %v1242 = vshrl.u32 %v1241, 7
        %v1243 = vsub.s32 0, %v1242
        %v1244 = vrot.slane %v1159, %v1243
        %v1245 = vlaneseq
        %v1246 = vshrl.u32 %v1245, 7
        %v1247 = vsub.s32 0, %v1246
        %v1248 = vrot.slane %v1160, %v1247
        %1249 = vrot.lane.b32.xlu0 %v1236, 112
        %v1250 = vpop.permute.xlu0 %1249
        %1251 = vrot.lane.b32.xlu0 %v1240, 112
        %v1252 = vpop.permute.xlu0 %1251
        %1253 = vrot.lane.b32.xlu0 %v1244, 112
        %v1254 = vpop.permute.xlu0 %1253
        %1255 = vrot.lane.b32.xlu0 %v1248, 112
        %v1256 = vpop.permute.xlu0 %1255
        %1261 = vst.msk [vmem:[#allocation4 + $0x9] sm:$0x1] %vm615, %v1250
        %1262 = vst.msk [vmem:[#allocation4 + $0x19] sm:$0x1] %vm615, %v1252
        %1263 = vst.msk [vmem:[#allocation4 + $0x29] sm:$0x1] %vm615, %v1254
        %1264 = vst.msk [vmem:[#allocation4 + $0x39] sm:$0x1] %vm615, %v1256
        %1265 = vrot.lane.b32.xlu0 %v1172, 96
        %v1266 = vpop.permute.xlu0 %1265
        %1267 = vrot.lane.b32.xlu0 %v1176, 96
        %v1268 = vpop.permute.xlu0 %1267
        %1269 = vrot.lane.b32.xlu0 %v1180, 96
        %v1270 = vpop.permute.xlu0 %1269
        %1271 = vrot.lane.b32.xlu0 %v1184, 96
        %v1272 = vpop.permute.xlu0 %1271
        %1277 = vst.msk [vmem:[#allocation2 + $0xa] sm:$0x1] %vm615, %v1266
        %1278 = vst.msk [vmem:[#allocation2 + $0x1a] sm:$0x1] %vm615, %v1268
        %1279 = vst.msk [vmem:[#allocation2 + $0x2a] sm:$0x1] %vm615, %v1270
        %1280 = vst.msk [vmem:[#allocation2 + $0x3a] sm:$0x1] %vm615, %v1272
        %1281 = vrot.lane.b32.xlu0 %v1204, 96
        %v1282 = vpop.permute.xlu0 %1281
        %1283 = vrot.lane.b32.xlu0 %v1208, 96
        %v1284 = vpop.permute.xlu0 %1283
        %1285 = vrot.lane.b32.xlu0 %v1212, 96
        %v1286 = vpop.permute.xlu0 %1285
        %1287 = vrot.lane.b32.xlu0 %v1216, 96
        %v1288 = vpop.permute.xlu0 %1287
        %1293 = vst.msk [vmem:[#allocation3 + $0xa] sm:$0x1] %vm615, %v1282
        %1294 = vst.msk [vmem:[#allocation3 + $0x1a] sm:$0x1] %vm615, %v1284
        %1295 = vst.msk [vmem:[#allocation3 + $0x2a] sm:$0x1] %vm615, %v1286
        %1296 = vst.msk [vmem:[#allocation3 + $0x3a] sm:$0x1] %vm615, %v1288
        %1297 = vrot.lane.b32.xlu0 %v1236, 96
        %v1298 = vpop.permute.xlu0 %1297
        %1299 = vrot.lane.b32.xlu0 %v1240, 96
        %v1300 = vpop.permute.xlu0 %1299
        %1301 = vrot.lane.b32.xlu0 %v1244, 96
        %v1302 = vpop.permute.xlu0 %1301
        %1303 = vrot.lane.b32.xlu0 %v1248, 96
        %v1304 = vpop.permute.xlu0 %1303
        %1309 = vst.msk [vmem:[#allocation4 + $0xa] sm:$0x1] %vm615, %v1298
        %1310 = vst.msk [vmem:[#allocation4 + $0x1a] sm:$0x1] %vm615, %v1300
        %1311 = vst.msk [vmem:[#allocation4 + $0x2a] sm:$0x1] %vm615, %v1302
        %1312 = vst.msk [vmem:[#allocation4 + $0x3a] sm:$0x1] %vm615, %v1304
        %1313 = vrot.lane.b32.xlu0 %v1172, 80
        %v1314 = vpop.permute.xlu0 %1313
        %1315 = vrot.lane.b32.xlu0 %v1176, 80
        %v1316 = vpop.permute.xlu0 %1315
        %1317 = vrot.lane.b32.xlu0 %v1180, 80
        %v1318 = vpop.permute.xlu0 %1317
        %1319 = vrot.lane.b32.xlu0 %v1184, 80
        %v1320 = vpop.permute.xlu0 %1319
        %1325 = vst.msk [vmem:[#allocation2 + $0xb] sm:$0x1] %vm615, %v1314
        %1326 = vst.msk [vmem:[#allocation2 + $0x1b] sm:$0x1] %vm615, %v1316
        %1327 = vst.msk [vmem:[#allocation2 + $0x2b] sm:$0x1] %vm615, %v1318
        %1328 = vst.msk [vmem:[#allocation2 + $0x3b] sm:$0x1] %vm615, %v1320
        %1329 = vrot.lane.b32.xlu0 %v1204, 80
        %v1330 = vpop.permute.xlu0 %1329
        %1331 = vrot.lane.b32.xlu0 %v1208, 80
        %v1332 = vpop.permute.xlu0 %1331
        %1333 = vrot.lane.b32.xlu0 %v1212, 80
        %v1334 = vpop.permute.xlu0 %1333
        %1335 = vrot.lane.b32.xlu0 %v1216, 80
        %v1336 = vpop.permute.xlu0 %1335
        %1341 = vst.msk [vmem:[#allocation3 + $0xb] sm:$0x1] %vm615, %v1330
        %1342 = vst.msk [vmem:[#allocation3 + $0x1b] sm:$0x1] %vm615, %v1332
        %1343 = vst.msk [vmem:[#allocation3 + $0x2b] sm:$0x1] %vm615, %v1334
        %1344 = vst.msk [vmem:[#allocation3 + $0x3b] sm:$0x1] %vm615, %v1336
        %1345 = vrot.lane.b32.xlu0 %v1236, 80
        %v1346 = vpop.permute.xlu0 %1345
        %1347 = vrot.lane.b32.xlu0 %v1240, 80
        %v1348 = vpop.permute.xlu0 %1347
        %1349 = vrot.lane.b32.xlu0 %v1244, 80
        %v1350 = vpop.permute.xlu0 %1349
        %1351 = vrot.lane.b32.xlu0 %v1248, 80
        %v1352 = vpop.permute.xlu0 %1351
        %1357 = vst.msk [vmem:[#allocation4 + $0xb] sm:$0x1] %vm615, %v1346
        %1358 = vst.msk [vmem:[#allocation4 + $0x1b] sm:$0x1] %vm615, %v1348
        %1359 = vst.msk [vmem:[#allocation4 + $0x2b] sm:$0x1] %vm615, %v1350
        %1360 = vst.msk [vmem:[#allocation4 + $0x3b] sm:$0x1] %vm615, %v1352
        %1361 = vrot.lane.b32.xlu0 %v1172, 64
        %v1362 = vpop.permute.xlu0 %1361
        %1363 = vrot.lane.b32.xlu0 %v1176, 64
        %v1364 = vpop.permute.xlu0 %1363
        %1365 = vrot.lane.b32.xlu0 %v1180, 64
        %v1366 = vpop.permute.xlu0 %1365
        %1367 = vrot.lane.b32.xlu0 %v1184, 64
        %v1368 = vpop.permute.xlu0 %1367
        %1373 = vst.msk [vmem:[#allocation2 + $0xc] sm:$0x1] %vm615, %v1362
        %1374 = vst.msk [vmem:[#allocation2 + $0x1c] sm:$0x1] %vm615, %v1364
        %1375 = vst.msk [vmem:[#allocation2 + $0x2c] sm:$0x1] %vm615, %v1366
        %1376 = vst.msk [vmem:[#allocation2 + $0x3c] sm:$0x1] %vm615, %v1368
        %1377 = vrot.lane.b32.xlu0 %v1204, 64
        %v1378 = vpop.permute.xlu0 %1377
        %1379 = vrot.lane.b32.xlu0 %v1208, 64
        %v1380 = vpop.permute.xlu0 %1379
        %1381 = vrot.lane.b32.xlu0 %v1212, 64
        %v1382 = vpop.permute.xlu0 %1381
        %1383 = vrot.lane.b32.xlu0 %v1216, 64
        %v1384 = vpop.permute.xlu0 %1383
        %1389 = vst.msk [vmem:[#allocation3 + $0xc] sm:$0x1] %vm615, %v1378
        %1390 = vst.msk [vmem:[#allocation3 + $0x1c] sm:$0x1] %vm615, %v1380
        %1391 = vst.msk [vmem:[#allocation3 + $0x2c] sm:$0x1] %vm615, %v1382
        %1392 = vst.msk [vmem:[#allocation3 + $0x3c] sm:$0x1] %vm615, %v1384
        %1393 = vrot.lane.b32.xlu0 %v1236, 64
        %v1394 = vpop.permute.xlu0 %1393
        %1395 = vrot.lane.b32.xlu0 %v1240, 64
        %v1396 = vpop.permute.xlu0 %1395
        %1397 = vrot.lane.b32.xlu0 %v1244, 64
        %v1398 = vpop.permute.xlu0 %1397
        %1399 = vrot.lane.b32.xlu0 %v1248, 64
        %v1400 = vpop.permute.xlu0 %1399
        %1405 = vst.msk [vmem:[#allocation4 + $0xc] sm:$0x1] %vm615, %v1394
        %1406 = vst.msk [vmem:[#allocation4 + $0x1c] sm:$0x1] %vm615, %v1396
        %1407 = vst.msk [vmem:[#allocation4 + $0x2c] sm:$0x1] %vm615, %v1398
        %1408 = vst.msk [vmem:[#allocation4 + $0x3c] sm:$0x1] %vm615, %v1400
        %1409 = vrot.lane.b32.xlu0 %v1172, 48
        %v1410 = vpop.permute.xlu0 %1409
        %1411 = vrot.lane.b32.xlu0 %v1176, 48
        %v1412 = vpop.permute.xlu0 %1411
        %1413 = vrot.lane.b32.xlu0 %v1180, 48
        %v1414 = vpop.permute.xlu0 %1413
        %1415 = vrot.lane.b32.xlu0 %v1184, 48
        %v1416 = vpop.permute.xlu0 %1415
        %1421 = vst.msk [vmem:[#allocation2 + $0xd] sm:$0x1] %vm615, %v1410
        %1422 = vst.msk [vmem:[#allocation2 + $0x1d] sm:$0x1] %vm615, %v1412
        %1423 = vst.msk [vmem:[#allocation2 + $0x2d] sm:$0x1] %vm615, %v1414
        %1424 = vst.msk [vmem:[#allocation2 + $0x3d] sm:$0x1] %vm615, %v1416
        %1425 = vrot.lane.b32.xlu0 %v1204, 48
        %v1426 = vpop.permute.xlu0 %1425
        %1427 = vrot.lane.b32.xlu0 %v1208, 48
        %v1428 = vpop.permute.xlu0 %1427
        %1429 = vrot.lane.b32.xlu0 %v1212, 48
        %v1430 = vpop.permute.xlu0 %1429
        %1431 = vrot.lane.b32.xlu0 %v1216, 48
        %v1432 = vpop.permute.xlu0 %1431
        %1437 = vst.msk [vmem:[#allocation3 + $0xd] sm:$0x1] %vm615, %v1426
        %1438 = vst.msk [vmem:[#allocation3 + $0x1d] sm:$0x1] %vm615, %v1428
        %1439 = vst.msk [vmem:[#allocation3 + $0x2d] sm:$0x1] %vm615, %v1430
        %1440 = vst.msk [vmem:[#allocation3 + $0x3d] sm:$0x1] %vm615, %v1432
        %1441 = vrot.lane.b32.xlu0 %v1236, 48
        %v1442 = vpop.permute.xlu0 %1441
        %1443 = vrot.lane.b32.xlu0 %v1240, 48
        %v1444 = vpop.permute.xlu0 %1443
        %1445 = vrot.lane.b32.xlu0 %v1244, 48
        %v1446 = vpop.permute.xlu0 %1445
        %1447 = vrot.lane.b32.xlu0 %v1248, 48
        %v1448 = vpop.permute.xlu0 %1447
        %1453 = vst.msk [vmem:[#allocation4 + $0xd] sm:$0x1] %vm615, %v1442
        %1454 = vst.msk [vmem:[#allocation4 + $0x1d] sm:$0x1] %vm615, %v1444
        %1455 = vst.msk [vmem:[#allocation4 + $0x2d] sm:$0x1] %vm615, %v1446
        %1456 = vst.msk [vmem:[#allocation4 + $0x3d] sm:$0x1] %vm615, %v1448
        %1457 = vrot.lane.b32.xlu0 %v1172, 32
        %v1458 = vpop.permute.xlu0 %1457
        %1459 = vrot.lane.b32.xlu0 %v1176, 32
        %v1460 = vpop.permute.xlu0 %1459
        %1461 = vrot.lane.b32.xlu0 %v1180, 32
        %v1462 = vpop.permute.xlu0 %1461
        %1463 = vrot.lane.b32.xlu0 %v1184, 32
        %v1464 = vpop.permute.xlu0 %1463
        %1469 = vst.msk [vmem:[#allocation2 + $0xe] sm:$0x1] %vm615, %v1458
        %1470 = vst.msk [vmem:[#allocation2 + $0x1e] sm:$0x1] %vm615, %v1460
        %1471 = vst.msk [vmem:[#allocation2 + $0x2e] sm:$0x1] %vm615, %v1462
        %1472 = vst.msk [vmem:[#allocation2 + $0x3e] sm:$0x1] %vm615, %v1464
        %1473 = vrot.lane.b32.xlu0 %v1204, 32
        %v1474 = vpop.permute.xlu0 %1473
        %1475 = vrot.lane.b32.xlu0 %v1208, 32
        %v1476 = vpop.permute.xlu0 %1475
        %1477 = vrot.lane.b32.xlu0 %v1212, 32
        %v1478 = vpop.permute.xlu0 %1477
        %1479 = vrot.lane.b32.xlu0 %v1216, 32
        %v1480 = vpop.permute.xlu0 %1479
        %1485 = vst.msk [vmem:[#allocation3 + $0xe] sm:$0x1] %vm615, %v1474
        %1486 = vst.msk [vmem:[#allocation3 + $0x1e] sm:$0x1] %vm615, %v1476
        %1487 = vst.msk [vmem:[#allocation3 + $0x2e] sm:$0x1] %vm615, %v1478
        %1488 = vst.msk [vmem:[#allocation3 + $0x3e] sm:$0x1] %vm615, %v1480
        %1489 = vrot.lane.b32.xlu0 %v1236, 32
        %v1490 = vpop.permute.xlu0 %1489
        %1491 = vrot.lane.b32.xlu0 %v1240, 32
        %v1492 = vpop.permute.xlu0 %1491
        %1493 = vrot.lane.b32.xlu0 %v1244, 32
        %v1494 = vpop.permute.xlu0 %1493
        %1495 = vrot.lane.b32.xlu0 %v1248, 32
        %v1496 = vpop.permute.xlu0 %1495
        %1501 = vst.msk [vmem:[#allocation4 + $0xe] sm:$0x1] %vm615, %v1490
        %1502 = vst.msk [vmem:[#allocation4 + $0x1e] sm:$0x1] %vm615, %v1492
        %1503 = vst.msk [vmem:[#allocation4 + $0x2e] sm:$0x1] %vm615, %v1494
        %1504 = vst.msk [vmem:[#allocation4 + $0x3e] sm:$0x1] %vm615, %v1496
        %1505 = vrot.lane.b32.xlu0 %v1172, 16
        %v1506 = vpop.permute.xlu0 %1505
        %1507 = vrot.lane.b32.xlu0 %v1176, 16
        %v1508 = vpop.permute.xlu0 %1507
        %1509 = vrot.lane.b32.xlu0 %v1180, 16
        %v1510 = vpop.permute.xlu0 %1509
        %1511 = vrot.lane.b32.xlu0 %v1184, 16
        %v1512 = vpop.permute.xlu0 %1511
        %1517 = vst.msk [vmem:[#allocation2 + $0xf] sm:$0x1] %vm615, %v1506
        %1518 = vst.msk [vmem:[#allocation2 + $0x1f] sm:$0x1] %vm615, %v1508
        %1519 = vst.msk [vmem:[#allocation2 + $0x2f] sm:$0x1] %vm615, %v1510
        %1520 = vst.msk [vmem:[#allocation2 + $0x3f] sm:$0x1] %vm615, %v1512
        %1521 = vrot.lane.b32.xlu0 %v1204, 16
        %v1522 = vpop.permute.xlu0 %1521
        %1523 = vrot.lane.b32.xlu0 %v1208, 16
        %v1524 = vpop.permute.xlu0 %1523
        %1525 = vrot.lane.b32.xlu0 %v1212, 16
        %v1526 = vpop.permute.xlu0 %1525
        %1527 = vrot.lane.b32.xlu0 %v1216, 16
        %v1528 = vpop.permute.xlu0 %1527
        %1533 = vst.msk [vmem:[#allocation3 + $0xf] sm:$0x1] %vm615, %v1522
        %1534 = vst.msk [vmem:[#allocation3 + $0x1f] sm:$0x1] %vm615, %v1524
        %1535 = vst.msk [vmem:[#allocation3 + $0x2f] sm:$0x1] %vm615, %v1526
        %1536 = vst.msk [vmem:[#allocation3 + $0x3f] sm:$0x1] %vm615, %v1528
        %1537 = vrot.lane.b32.xlu0 %v1236, 16
        %v1538 = vpop.permute.xlu0 %1537
        %1539 = vrot.lane.b32.xlu0 %v1240, 16
        %v1540 = vpop.permute.xlu0 %1539
        %1541 = vrot.lane.b32.xlu0 %v1244, 16
        %v1542 = vpop.permute.xlu0 %1541
        %1543 = vrot.lane.b32.xlu0 %v1248, 16
        %v1544 = vpop.permute.xlu0 %1543
        %1549 = vst.msk [vmem:[#allocation4 + $0xf] sm:$0x1] %vm615, %v1538
        %1550 = vst.msk [vmem:[#allocation4 + $0x1f] sm:$0x1] %vm615, %v1540
        %1551 = vst.msk [vmem:[#allocation4 + $0x2f] sm:$0x1] %vm615, %v1542
        %1552 = vst.msk [vmem:[#allocation4 + $0x3f] sm:$0x1] %vm615, %v1544
        %v1553 = vld [vmem:[#allocation2] sm:$0xff]
        %v1554 = vld [vmem:[#allocation2 + $0x8] sm:$0xff]
        %v1555 = vld [vmem:[#allocation2 + $0x10] sm:$0xff]
        %v1556 = vld [vmem:[#allocation2 + $0x18] sm:$0xff]
        %v1557 = vld [vmem:[#allocation2 + $0x20] sm:$0xff]
        %v1558 = vld [vmem:[#allocation2 + $0x28] sm:$0xff]
        %v1559 = vld [vmem:[#allocation2 + $0x30] sm:$0xff]
        %v1560 = vld [vmem:[#allocation2 + $0x38] sm:$0xff]
        %v1561 = vld [vmem:[#allocation3] sm:$0xff]
        %v1562 = vld [vmem:[#allocation3 + $0x8] sm:$0xff]
        %v1563 = vld [vmem:[#allocation3 + $0x10] sm:$0xff]
        %v1564 = vld [vmem:[#allocation3 + $0x18] sm:$0xff]
        %v1565 = vld [vmem:[#allocation3 + $0x20] sm:$0xff]
        %v1566 = vld [vmem:[#allocation3 + $0x28] sm:$0xff]
        %v1567 = vld [vmem:[#allocation3 + $0x30] sm:$0xff]
        %v1568 = vld [vmem:[#allocation3 + $0x38] sm:$0xff]
        %v1569 = vld [vmem:[#allocation4] sm:$0xff]
        %v1570 = vld [vmem:[#allocation4 + $0x8] sm:$0xff]
        %v1571 = vld [vmem:[#allocation4 + $0x10] sm:$0xff]
        %v1572 = vld [vmem:[#allocation4 + $0x18] sm:$0xff]
        %v1573 = vld [vmem:[#allocation4 + $0x20] sm:$0xff]
        %v1574 = vld [vmem:[#allocation4 + $0x28] sm:$0xff]
        %v1575 = vld [vmem:[#allocation4 + $0x30] sm:$0xff]
        %v1576 = vld [vmem:[#allocation4 + $0x38] sm:$0xff]
        %vm1577 = vcmask 130048
        %v1579 = vsel %vm1577, %v1553, 0
        %v1582 = vsel %vm1577, %v1554, 0
        %v1585 = vsel %vm1577, %v1561, 0
        %v1588 = vsel %vm1577, %v1562, 0
        %1590 = vmatprep.subr.mxu0 0.0
        %1591 = vmatpush1.xpose.msra.mxu0 %v1585
        %1592 = vmatprep.subr.mxu0 0.0
        %1593 = vmatpush1.xpose.msra.mxu0 %v1588
        %1594 = vmatprep.subr.mxu0 0.0
        %1595 = vmatpush1.xpose.msra.mxu0 0.0
        %1596 = vmatprep.subr.mxu0 0.0
        %1597 = vmatpush1.xpose.msra.mxu0 0.0
        %1598 = vmatprep.subr.mxu0 0.0
        %1599 = vmatpush1.xpose.msra.mxu0 0.0
        %1600 = vmatprep.subr.mxu0 0.0
        %1601 = vmatpush1.xpose.msra.mxu0 0.0
        %1602 = vmatprep.subr.mxu0 0.0
        %1603 = vmatpush1.xpose.msra.mxu0 0.0
        %1604 = vmatprep.subr.mxu0 0.0
        %1605 = vmatpush1.xpose.msra.mxu0 0.0
        %1606 = vmatprep.subr.mxu0 0.0
        %1607 = vmatpush1.xpose.msra.mxu0 0.0
        %1608 = vmatprep.subr.mxu0 0.0
        %1609 = vmatpush1.xpose.msra.mxu0 0.0
        %1610 = vmatprep.subr.mxu0 0.0
        %1611 = vmatpush1.xpose.msra.mxu0 0.0
        %1612 = vmatprep.subr.mxu0 0.0
        %1613 = vmatpush1.xpose.msra.mxu0 0.0
        %1614 = vmatprep.subr.mxu0 0.0
        %1615 = vmatpush1.xpose.msra.mxu0 0.0
        %1616 = vmatprep.subr.mxu0 0.0
        %1617 = vmatpush1.xpose.msra.mxu0 0.0
        %1618 = vmatprep.subr.mxu0 0.0
        %1619 = vmatpush1.xpose.msra.mxu0 0.0
        %1620 = vmatprep.subr.mxu0 0.0
        %1621 = vmatpush1.xpose.msra.mxu0 0.0
        %1622 = vmatprep.subr.mxu0 0.0
        %1623 = vmatpush1.xpose.msra.mxu0 0.0
        %1624 = vmatprep.subr.mxu0 0.0
        %1625 = vmatpush1.xpose.msra.mxu0 0.0
        %1626 = vmatprep.subr.mxu0 0.0
        %1627 = vmatpush1.xpose.msra.mxu0 0.0
        %1628 = vmatprep.subr.mxu0 0.0
        %1629 = vmatpush1.xpose.msra.mxu0 0.0
        %1630 = vmatprep.subr.mxu0 0.0
        %1631 = vmatpush1.xpose.msra.mxu0 0.0
        %1632 = vmatprep.subr.mxu0 0.0
        %1633 = vmatpush1.xpose.msra.mxu0 0.0
        %1634 = vmatprep.subr.mxu0 0.0
        %1635 = vmatpush1.xpose.msra.mxu0 0.0
        %1636 = vmatprep.subr.mxu0 0.0
        %1637 = vmatpush1.xpose.msra.mxu0 0.0
        %1638 = vmatprep.subr.mxu0 0.0
        %1639 = vmatpush1.xpose.msra.mxu0 0.0
        %1640 = vmatprep.subr.mxu0 0.0
        %1641 = vmatpush1.xpose.msra.mxu0 0.0
        %1642 = vmatprep.subr.mxu0 0.0
        %1643 = vmatpush1.xpose.msra.mxu0 0.0
        %1644 = vmatprep.subr.mxu0 0.0
        %1645 = vmatpush1.xpose.msra.mxu0 0.0
        %1646 = vmatprep.subr.mxu0 0.0
        %1647 = vmatpush1.xpose.msra.mxu0 0.0
        %1648 = vmatprep.subr.mxu0 0.0
        %1649 = vmatpush1.xpose.msra.mxu0 0.0
        %1650 = vmatprep.subr.mxu0 0.0
        %1651 = vmatpush1.xpose.msra.mxu0 0.0
        %1652 = vmatprep.subr.mxu0 0.0
        %1653 = vmatpush1.xpose.msra.mxu0 0.0
        %1654 = vmatprep.mubr.f32.mxu0 0.0
        %1655 = vmatmul.mubr.f32.gmra.mrb[0].mxu0 %v1579
        %v1656 = vpop.f32.mrb[0].mxu0
        %v1657 = vadd.f32 0.0, %v1656
        %v1658 = vpop.f32.mrb[0].mxu0
        %1659 = vmatprep.mubr.f32.mxu0 0.0
        %1660 = vmatmul.mubr.f32.gmra.mrb[0].mxu0 %v1582
        %v1661 = vpop.f32.mrb[0].mxu0
        %v1662 = vadd.f32 0.0, %v1661
        %v1663 = vpop.f32.mrb[0].mxu0
        %1664 = vdwg.mxu0
        %v1666 = vsel %vm1577, %v1555, 0
        %v1669 = vsel %vm1577, %v1556, 0
        %v1672 = vsel %vm1577, %v1563, 0
        %v1675 = vsel %vm1577, %v1564, 0
        %1677 = vmatprep.subr.mxu0 0.0
        %1678 = vmatpush1.xpose.msra.mxu0 %v1672
        %1679 = vmatprep.subr.mxu0 0.0
        %1680 = vmatpush1.xpose.msra.mxu0 %v1675
        %1681 = vmatprep.subr.mxu0 0.0
        %1682 = vmatpush1.xpose.msra.mxu0 0.0
        %1683 = vmatprep.subr.mxu0 0.0
        %1684 = vmatpush1.xpose.msra.mxu0 0.0
        %1685 = vmatprep.subr.mxu0 0.0
        %1686 = vmatpush1.xpose.msra.mxu0 0.0
        %1687 = vmatprep.subr.mxu0 0.0
        %1688 = vmatpush1.xpose.msra.mxu0 0.0
        %1689 = vmatprep.subr.mxu0 0.0
        %1690 = vmatpush1.xpose.msra.mxu0 0.0
        %1691 = vmatprep.subr.mxu0 0.0
        %1692 = vmatpush1.xpose.msra.mxu0 0.0
        %1693 = vmatprep.subr.mxu0 0.0
        %1694 = vmatpush1.xpose.msra.mxu0 0.0
        %1695 = vmatprep.subr.mxu0 0.0
        %1696 = vmatpush1.xpose.msra.mxu0 0.0
        %1697 = vmatprep.subr.mxu0 0.0
        %1698 = vmatpush1.xpose.msra.mxu0 0.0
        %1699 = vmatprep.subr.mxu0 0.0
        %1700 = vmatpush1.xpose.msra.mxu0 0.0
        %1701 = vmatprep.subr.mxu0 0.0
        %1702 = vmatpush1.xpose.msra.mxu0 0.0
        %1703 = vmatprep.subr.mxu0 0.0
        %1704 = vmatpush1.xpose.msra.mxu0 0.0
        %1705 = vmatprep.subr.mxu0 0.0
        %1706 = vmatpush1.xpose.msra.mxu0 0.0
        %1707 = vmatprep.subr.mxu0 0.0
        %1708 = vmatpush1.xpose.msra.mxu0 0.0
        %1709 = vmatprep.subr.mxu0 0.0
        %1710 = vmatpush1.xpose.msra.mxu0 0.0
        %1711 = vmatprep.subr.mxu0 0.0
        %1712 = vmatpush1.xpose.msra.mxu0 0.0
        %1713 = vmatprep.subr.mxu0 0.0
        %1714 = vmatpush1.xpose.msra.mxu0 0.0
        %1715 = vmatprep.subr.mxu0 0.0
        %1716 = vmatpush1.xpose.msra.mxu0 0.0
        %1717 = vmatprep.subr.mxu0 0.0
        %1718 = vmatpush1.xpose.msra.mxu0 0.0
        %1719 = vmatprep.subr.mxu0 0.0
        %1720 = vmatpush1.xpose.msra.mxu0 0.0
        %1721 = vmatprep.subr.mxu0 0.0
        %1722 = vmatpush1.xpose.msra.mxu0 0.0
        %1723 = vmatprep.subr.mxu0 0.0
        %1724 = vmatpush1.xpose.msra.mxu0 0.0
        %1725 = vmatprep.subr.mxu0 0.0
        %1726 = vmatpush1.xpose.msra.mxu0 0.0
        %1727 = vmatprep.subr.mxu0 0.0
        %1728 = vmatpush1.xpose.msra.mxu0 0.0
        %1729 = vmatprep.subr.mxu0 0.0
        %1730 = vmatpush1.xpose.msra.mxu0 0.0
        %1731 = vmatprep.subr.mxu0 0.0
        %1732 = vmatpush1.xpose.msra.mxu0 0.0
        %1733 = vmatprep.subr.mxu0 0.0
        %1734 = vmatpush1.xpose.msra.mxu0 0.0
        %1735 = vmatprep.subr.mxu0 0.0
        %1736 = vmatpush1.xpose.msra.mxu0 0.0
        %1737 = vmatprep.subr.mxu0 0.0
        %1738 = vmatpush1.xpose.msra.mxu0 0.0
        %1739 = vmatprep.subr.mxu0 0.0
        %1740 = vmatpush1.xpose.msra.mxu0 0.0
        %1741 = vmatprep.mubr.f32.mxu0 0.0
        %1742 = vmatmul.mubr.f32.gmra.mrb[0].mxu0 %v1666
        %v1743 = vpop.f32.mrb[0].mxu0
        %v1744 = vadd.f32 0.0, %v1743
        %v1745 = vpop.f32.mrb[0].mxu0
        %1746 = vmatprep.mubr.f32.mxu0 0.0
        %1747 = vmatmul.mubr.f32.gmra.mrb[0].mxu0 %v1669
        %v1748 = vpop.f32.mrb[0].mxu0
        %v1749 = vadd.f32 0.0, %v1748
        %v1750 = vpop.f32.mrb[0].mxu0
        %1751 = vdwg.mxu0
        %v1753 = vsel %vm1577, %v1557, 0
        %v1756 = vsel %vm1577, %v1558, 0
        %v1759 = vsel %vm1577, %v1565, 0
        %v1762 = vsel %vm1577, %v1566, 0
        %1764 = vmatprep.subr.mxu0 0.0
        %1765 = vmatpush1.xpose.msra.mxu0 %v1759
        %1766 = vmatprep.subr.mxu0 0.0
        %1767 = vmatpush1.xpose.msra.mxu0 %v1762
        %1768 = vmatprep.subr.mxu0 0.0
        %1769 = vmatpush1.xpose.msra.mxu0 0.0
        %1770 = vmatprep.subr.mxu0 0.0
        %1771 = vmatpush1.xpose.msra.mxu0 0.0
        %1772 = vmatprep.subr.mxu0 0.0
        %1773 = vmatpush1.xpose.msra.mxu0 0.0
        %1774 = vmatprep.subr.mxu0 0.0
        %1775 = vmatpush1.xpose.msra.mxu0 0.0
        %1776 = vmatprep.subr.mxu0 0.0
        %1777 = vmatpush1.xpose.msra.mxu0 0.0
        %1778 = vmatprep.subr.mxu0 0.0
        %1779 = vmatpush1.xpose.msra.mxu0 0.0
        %1780 = vmatprep.subr.mxu0 0.0
        %1781 = vmatpush1.xpose.msra.mxu0 0.0
        %1782 = vmatprep.subr.mxu0 0.0
        %1783 = vmatpush1.xpose.msra.mxu0 0.0
        %1784 = vmatprep.subr.mxu0 0.0
        %1785 = vmatpush1.xpose.msra.mxu0 0.0
        %1786 = vmatprep.subr.mxu0 0.0
        %1787 = vmatpush1.xpose.msra.mxu0 0.0
        %1788 = vmatprep.subr.mxu0 0.0
        %1789 = vmatpush1.xpose.msra.mxu0 0.0
        %1790 = vmatprep.subr.mxu0 0.0
        %1791 = vmatpush1.xpose.msra.mxu0 0.0
        %1792 = vmatprep.subr.mxu0 0.0
        %1793 = vmatpush1.xpose.msra.mxu0 0.0
        %1794 = vmatprep.subr.mxu0 0.0
        %1795 = vmatpush1.xpose.msra.mxu0 0.0
        %1796 = vmatprep.subr.mxu0 0.0
        %1797 = vmatpush1.xpose.msra.mxu0 0.0
        %1798 = vmatprep.subr.mxu0 0.0
        %1799 = vmatpush1.xpose.msra.mxu0 0.0
        %1800 = vmatprep.subr.mxu0 0.0
        %1801 = vmatpush1.xpose.msra.mxu0 0.0
        %1802 = vmatprep.subr.mxu0 0.0
        %1803 = vmatpush1.xpose.msra.mxu0 0.0
        %1804 = vmatprep.subr.mxu0 0.0
        %1805 = vmatpush1.xpose.msra.mxu0 0.0
        %1806 = vmatprep.subr.mxu0 0.0
        %1807 = vmatpush1.xpose.msra.mxu0 0.0
        %1808 = vmatprep.subr.mxu0 0.0
        %1809 = vmatpush1.xpose.msra.mxu0 0.0
        %1810 = vmatprep.subr.mxu0 0.0
        %1811 = vmatpush1.xpose.msra.mxu0 0.0
        %1812 = vmatprep.subr.mxu0 0.0
        %1813 = vmatpush1.xpose.msra.mxu0 0.0
        %1814 = vmatprep.subr.mxu0 0.0
        %1815 = vmatpush1.xpose.msra.mxu0 0.0
        %1816 = vmatprep.subr.mxu0 0.0
        %1817 = vmatpush1.xpose.msra.mxu0 0.0
        %1818 = vmatprep.subr.mxu0 0.0
        %1819 = vmatpush1.xpose.msra.mxu0 0.0
        %1820 = vmatprep.subr.mxu0 0.0
        %1821 = vmatpush1.xpose.msra.mxu0 0.0
        %1822 = vmatprep.subr.mxu0 0.0
        %1823 = vmatpush1.xpose.msra.mxu0 0.0
        %1824 = vmatprep.subr.mxu0 0.0
        %1825 = vmatpush1.xpose.msra.mxu0 0.0
        %1826 = vmatprep.subr.mxu0 0.0
        %1827 = vmatpush1.xpose.msra.mxu0 0.0
        %1828 = vmatprep.mubr.f32.mxu0 0.0
        %1829 = vmatmul.mubr.f32.gmra.mrb[0].mxu0 %v1753
        %v1830 = vpop.f32.mrb[0].mxu0
        %v1831 = vadd.f32 0.0, %v1830
        %v1832 = vpop.f32.mrb[0].mxu0
        %1833 = vmatprep.mubr.f32.mxu0 0.0
        %1834 = vmatmul.mubr.f32.gmra.mrb[0].mxu0 %v1756
        %v1835 = vpop.f32.mrb[0].mxu0
        %v1836 = vadd.f32 0.0, %v1835
        %v1837 = vpop.f32.mrb[0].mxu0
        %1838 = vdwg.mxu0
        %v1840 = vsel %vm1577, %v1559, 0
        %v1843 = vsel %vm1577, %v1560, 0
        %v1846 = vsel %vm1577, %v1567, 0
        %v1849 = vsel %vm1577, %v1568, 0
        %1851 = vmatprep.subr.mxu0 0.0
        %1852 = vmatpush1.xpose.msra.mxu0 %v1846
        %1853 = vmatprep.subr.mxu0 0.0
        %1854 = vmatpush1.xpose.msra.mxu0 %v1849
        %1855 = vmatprep.subr.mxu0 0.0
        %1856 = vmatpush1.xpose.msra.mxu0 0.0
        %1857 = vmatprep.subr.mxu0 0.0
        %1858 = vmatpush1.xpose.msra.mxu0 0.0
        %1859 = vmatprep.subr.mxu0 0.0
        %1860 = vmatpush1.xpose.msra.mxu0 0.0
        %1861 = vmatprep.subr.mxu0 0.0
        %1862 = vmatpush1.xpose.msra.mxu0 0.0
        %1863 = vmatprep.subr.mxu0 0.0
        %1864 = vmatpush1.xpose.msra.mxu0 0.0
        %1865 = vmatprep.subr.mxu0 0.0
        %1866 = vmatpush1.xpose.msra.mxu0 0.0
        %1867 = vmatprep.subr.mxu0 0.0
        %1868 = vmatpush1.xpose.msra.mxu0 0.0
        %1869 = vmatprep.subr.mxu0 0.0
        %1870 = vmatpush1.xpose.msra.mxu0 0.0
        %1871 = vmatprep.subr.mxu0 0.0
        %1872 = vmatpush1.xpose.msra.mxu0 0.0
        %1873 = vmatprep.subr.mxu0 0.0
        %1874 = vmatpush1.xpose.msra.mxu0 0.0
        %1875 = vmatprep.subr.mxu0 0.0
        %1876 = vmatpush1.xpose.msra.mxu0 0.0
        %1877 = vmatprep.subr.mxu0 0.0
        %1878 = vmatpush1.xpose.msra.mxu0 0.0
        %1879 = vmatprep.subr.mxu0 0.0
        %1880 = vmatpush1.xpose.msra.mxu0 0.0
        %1881 = vmatprep.subr.mxu0 0.0
        %1882 = vmatpush1.xpose.msra.mxu0 0.0
        %1883 = vmatprep.subr.mxu0 0.0
        %1884 = vmatpush1.xpose.msra.mxu0 0.0
        %1885 = vmatprep.subr.mxu0 0.0
        %1886 = vmatpush1.xpose.msra.mxu0 0.0
        %1887 = vmatprep.subr.mxu0 0.0
        %1888 = vmatpush1.xpose.msra.mxu0 0.0
        %1889 = vmatprep.subr.mxu0 0.0
        %1890 = vmatpush1.xpose.msra.mxu0 0.0
        %1891 = vmatprep.subr.mxu0 0.0
        %1892 = vmatpush1.xpose.msra.mxu0 0.0
        %1893 = vmatprep.subr.mxu0 0.0
        %1894 = vmatpush1.xpose.msra.mxu0 0.0
        %1895 = vmatprep.subr.mxu0 0.0
        %1896 = vmatpush1.xpose.msra.mxu0 0.0
        %1897 = vmatprep.subr.mxu0 0.0
        %1898 = vmatpush1.xpose.msra.mxu0 0.0
        %1899 = vmatprep.subr.mxu0 0.0
        %1900 = vmatpush1.xpose.msra.mxu0 0.0
        %1901 = vmatprep.subr.mxu0 0.0
        %1902 = vmatpush1.xpose.msra.mxu0 0.0
        %1903 = vmatprep.subr.mxu0 0.0
        %1904 = vmatpush1.xpose.msra.mxu0 0.0
        %1905 = vmatprep.subr.mxu0 0.0
        %1906 = vmatpush1.xpose.msra.mxu0 0.0
        %1907 = vmatprep.subr.mxu0 0.0
        %1908 = vmatpush1.xpose.msra.mxu0 0.0
        %1909 = vmatprep.subr.mxu0 0.0
        %1910 = vmatpush1.xpose.msra.mxu0 0.0
        %1911 = vmatprep.subr.mxu0 0.0
        %1912 = vmatpush1.xpose.msra.mxu0 0.0
        %1913 = vmatprep.subr.mxu0 0.0
        %1914 = vmatpush1.xpose.msra.mxu0 0.0
        %1915 = vmatprep.mubr.f32.mxu0 0.0
        %1916 = vmatmul.mubr.f32.gmra.mrb[0].mxu0 %v1840
        %v1917 = vpop.f32.mrb[0].mxu0
        %v1918 = vadd.f32 0.0, %v1917
        %v1919 = vpop.f32.mrb[0].mxu0
        %1920 = vmatprep.mubr.f32.mxu0 0.0
        %1921 = vmatmul.mubr.f32.gmra.mrb[0].mxu0 %v1843
        %v1922 = vpop.f32.mrb[0].mxu0
        %v1923 = vadd.f32 0.0, %v1922
        %v1924 = vpop.f32.mrb[0].mxu0
        %1925 = vdwg.mxu0
        %v1926 = vsel %vm1577, %v1657, -inf
        %1927 = vmax.xlane.f32.xlu0 %v1926
        %v1928 = vpop.xlane.xlu0 %1927
        %v1929 = vsel %vm1577, %v1662, -inf
        %1930 = vmax.xlane.f32.xlu0 %v1929
        %v1931 = vpop.xlane.xlu0 %1930
        %v1932 = vsel %vm1577, %v1744, -inf
        %1933 = vmax.xlane.f32.xlu0 %v1932
        %v1934 = vpop.xlane.xlu0 %1933
        %v1935 = vsel %vm1577, %v1749, -inf
        %1936 = vmax.xlane.f32.xlu0 %v1935
        %v1937 = vpop.xlane.xlu0 %1936
        %v1938 = vsel %vm1577, %v1831, -inf
        %1939 = vmax.xlane.f32.xlu0 %v1938
        %v1940 = vpop.xlane.xlu0 %1939
        %v1941 = vsel %vm1577, %v1836, -inf
        %1942 = vmax.xlane.f32.xlu0 %v1941
        %v1943 = vpop.xlane.xlu0 %1942
        %v1944 = vsel %vm1577, %v1918, -inf
        %1945 = vmax.xlane.f32.xlu0 %v1944
        %v1946 = vpop.xlane.xlu0 %1945
        %v1947 = vsel %vm1577, %v1923, -inf
        %1948 = vmax.xlane.f32.xlu0 %v1947
        %v1949 = vpop.xlane.xlu0 %1948
        %v1950 = vsub.f32 %v1657, %v1928
        %v1951 = vsub.f32 %v1662, %v1931
        %v1952 = vsub.f32 %v1744, %v1934
        %v1953 = vsub.f32 %v1749, %v1937
        %v1954 = vsub.f32 %v1831, %v1940
        %v1955 = vsub.f32 %v1836, %v1943
        %v1956 = vsub.f32 %v1918, %v1946
        %v1957 = vsub.f32 %v1923, %v1949
        %v1958 = vmul.f32 %v1950, 1.442695
        %v1959 = vpow.pop %v1958
        %v1960 = vmul.f32 %v1951, 1.442695
        %v1961 = vpow.pop %v1960
        %v1962 = vmul.f32 %v1952, 1.442695
        %v1963 = vpow.pop %v1962
        %v1964 = vmul.f32 %v1953, 1.442695
        %v1965 = vpow.pop %v1964
        %v1966 = vmul.f32 %v1954, 1.442695
        %v1967 = vpow.pop %v1966
        %v1968 = vmul.f32 %v1955, 1.442695
        %v1969 = vpow.pop %v1968
        %v1970 = vmul.f32 %v1956, 1.442695
        %v1971 = vpow.pop %v1970
        %v1972 = vmul.f32 %v1957, 1.442695
        %v1973 = vpow.pop %v1972
        %v1974 = vsel %vm1577, %v1959, 0.0
        %1975 = vadd.xlane.f32.xlu0 %v1974
        %v1976 = vpop.xlane.xlu0 %1975
        %v1977 = vsel %vm1577, %v1961, 0.0
        %1978 = vadd.xlane.f32.xlu0 %v1977
        %v1979 = vpop.xlane.xlu0 %1978
        %v1980 = vsel %vm1577, %v1963, 0.0
        %1981 = vadd.xlane.f32.xlu0 %v1980
        %v1982 = vpop.xlane.xlu0 %1981
        %v1983 = vsel %vm1577, %v1965, 0.0
        %1984 = vadd.xlane.f32.xlu0 %v1983
        %v1985 = vpop.xlane.xlu0 %1984
        %v1986 = vsel %vm1577, %v1967, 0.0
        %1987 = vadd.xlane.f32.xlu0 %v1986
        %v1988 = vpop.xlane.xlu0 %1987
        %v1989 = vsel %vm1577, %v1969, 0.0
        %1990 = vadd.xlane.f32.xlu0 %v1989
        %v1991 = vpop.xlane.xlu0 %1990
        %v1992 = vsel %vm1577, %v1971, 0.0
        %1993 = vadd.xlane.f32.xlu0 %v1992
        %v1994 = vpop.xlane.xlu0 %1993
        %v1995 = vsel %vm1577, %v1973, 0.0
        %1996 = vadd.xlane.f32.xlu0 %v1995
        %v1997 = vpop.xlane.xlu0 %1996
        %v1998 = vrcp.pop %v1976
        %v1999 = vrcp.pop %v1979
        %v2000 = vrcp.pop %v1982
        %v2001 = vrcp.pop %v1985
        %v2002 = vrcp.pop %v1988
        %v2003 = vrcp.pop %v1991
        %v2004 = vrcp.pop %v1994
        %v2005 = vrcp.pop %v1997
        %v2006 = vmul.f32 %v1959, %v1998
        %v2007 = vmul.f32 %v1961, %v1999
        %v2008 = vmul.f32 %v1963, %v2000
        %v2009 = vmul.f32 %v1965, %v2001
        %v2010 = vmul.f32 %v1967, %v2002
        %v2011 = vmul.f32 %v1969, %v2003
        %v2012 = vmul.f32 %v1971, %v2004
        %v2013 = vmul.f32 %v1973, %v2005
        %v2015 = vsel %vm1577, %v2006, 0
        %v2018 = vsel %vm1577, %v2007, 0
        %2020 = vmatprep.subr.mxu0 0.0
        %2021 = vmatpush1.msra.mxu0 %v1569
        %2022 = vmatprep.subr.mxu0 0.0
        %2023 = vmatpush1.msra.mxu0 %v1570
        %2024 = vmatprep.subr.mxu0 0.0
        %2025 = vmatpush1.msra.mxu0 0.0
        %2026 = vmatprep.subr.mxu0 0.0
        %2027 = vmatpush1.msra.mxu0 0.0
        %2028 = vmatprep.subr.mxu0 0.0
        %2029 = vmatpush1.msra.mxu0 0.0
        %2030 = vmatprep.subr.mxu0 0.0
        %2031 = vmatpush1.msra.mxu0 0.0
        %2032 = vmatprep.subr.mxu0 0.0
        %2033 = vmatpush1.msra.mxu0 0.0
        %2034 = vmatprep.subr.mxu0 0.0
        %2035 = vmatpush1.msra.mxu0 0.0
        %2036 = vmatprep.subr.mxu0 0.0
        %2037 = vmatpush1.msra.mxu0 0.0
        %2038 = vmatprep.subr.mxu0 0.0
        %2039 = vmatpush1.msra.mxu0 0.0
        %2040 = vmatprep.subr.mxu0 0.0
        %2041 = vmatpush1.msra.mxu0 0.0
        %2042 = vmatprep.subr.mxu0 0.0
        %2043 = vmatpush1.msra.mxu0 0.0
        %2044 = vmatprep.subr.mxu0 0.0
        %2045 = vmatpush1.msra.mxu0 0.0
        %2046 = vmatprep.subr.mxu0 0.0
        %2047 = vmatpush1.msra.mxu0 0.0
        %2048 = vmatprep.subr.mxu0 0.0
        %2049 = vmatpush1.msra.mxu0 0.0
        %2050 = vmatprep.subr.mxu0 0.0
        %2051 = vmatpush1.msra.mxu0 0.0
        %2052 = vmatprep.subr.mxu0 0.0
        %2053 = vmatpush1.msra.mxu0 0.0
        %2054 = vmatprep.subr.mxu0 0.0
        %2055 = vmatpush1.msra.mxu0 0.0
        %2056 = vmatprep.subr.mxu0 0.0
        %2057 = vmatpush1.msra.mxu0 0.0
        %2058 = vmatprep.subr.mxu0 0.0
        %2059 = vmatpush1.msra.mxu0 0.0
        %2060 = vmatprep.subr.mxu0 0.0
        %2061 = vmatpush1.msra.mxu0 0.0
        %2062 = vmatprep.subr.mxu0 0.0
        %2063 = vmatpush1.msra.mxu0 0.0
        %2064 = vmatprep.subr.mxu0 0.0
        %2065 = vmatpush1.msra.mxu0 0.0
        %2066 = vmatprep.subr.mxu0 0.0
        %2067 = vmatpush1.msra.mxu0 0.0
        %2068 = vmatprep.subr.mxu0 0.0
        %2069 = vmatpush1.msra.mxu0 0.0
        %2070 = vmatprep.subr.mxu0 0.0
        %2071 = vmatpush1.msra.mxu0 0.0
        %2072 = vmatprep.subr.mxu0 0.0
        %2073 = vmatpush1.msra.mxu0 0.0
        %2074 = vmatprep.subr.mxu0 0.0
        %2075 = vmatpush1.msra.mxu0 0.0
        %2076 = vmatprep.subr.mxu0 0.0
        %2077 = vmatpush1.msra.mxu0 0.0
        %2078 = vmatprep.subr.mxu0 0.0
        %2079 = vmatpush1.msra.mxu0 0.0
        %2080 = vmatprep.subr.mxu0 0.0
        %2081 = vmatpush1.msra.mxu0 0.0
        %2082 = vmatprep.subr.mxu0 0.0
        %2083 = vmatpush1.msra.mxu0 0.0
        %2084 = vmatprep.mubr.f32.mxu0 0.0
        %2085 = vmatmul.mubr.f32.gmra.mrb[0].mxu0 %v2015
        %v2086 = vpop.f32.mrb[0].mxu0
        %v2087 = vadd.f32 0.0, %v2086
        %v2088 = vpop.f32.mrb[0].mxu0
        %2089 = vmatprep.mubr.f32.mxu0 0.0
        %2090 = vmatmul.mubr.f32.gmra.mrb[0].mxu0 %v2018
        %v2091 = vpop.f32.mrb[0].mxu0
        %v2092 = vadd.f32 0.0, %v2091
        %v2093 = vpop.f32.mrb[0].mxu0
        %2094 = vdwg.mxu0
        %v2096 = vsel %vm1577, %v2008, 0
        %v2099 = vsel %vm1577, %v2009, 0
        %2101 = vmatprep.subr.mxu0 0.0
        %2102 = vmatpush1.msra.mxu0 %v1571
        %2103 = vmatprep.subr.mxu0 0.0
        %2104 = vmatpush1.msra.mxu0 %v1572
        %2105 = vmatprep.subr.mxu0 0.0
        %2106 = vmatpush1.msra.mxu0 0.0
        %2107 = vmatprep.subr.mxu0 0.0
        %2108 = vmatpush1.msra.mxu0 0.0
        %2109 = vmatprep.subr.mxu0 0.0
        %2110 = vmatpush1.msra.mxu0 0.0
        %2111 = vmatprep.subr.mxu0 0.0
        %2112 = vmatpush1.msra.mxu0 0.0
        %2113 = vmatprep.subr.mxu0 0.0
        %2114 = vmatpush1.msra.mxu0 0.0
        %2115 = vmatprep.subr.mxu0 0.0
        %2116 = vmatpush1.msra.mxu0 0.0
        %2117 = vmatprep.subr.mxu0 0.0
        %2118 = vmatpush1.msra.mxu0 0.0
        %2119 = vmatprep.subr.mxu0 0.0
        %2120 = vmatpush1.msra.mxu0 0.0
        %2121 = vmatprep.subr.mxu0 0.0
        %2122 = vmatpush1.msra.mxu0 0.0
        %2123 = vmatprep.subr.mxu0 0.0
        %2124 = vmatpush1.msra.mxu0 0.0
        %2125 = vmatprep.subr.mxu0 0.0
        %2126 = vmatpush1.msra.mxu0 0.0
        %2127 = vmatprep.subr.mxu0 0.0
        %2128 = vmatpush1.msra.mxu0 0.0
        %2129 = vmatprep.subr.mxu0 0.0
        %2130 = vmatpush1.msra.mxu0 0.0
        %2131 = vmatprep.subr.mxu0 0.0
        %2132 = vmatpush1.msra.mxu0 0.0
        %2133 = vmatprep.subr.mxu0 0.0
        %2134 = vmatpush1.msra.mxu0 0.0
        %2135 = vmatprep.subr.mxu0 0.0
        %2136 = vmatpush1.msra.mxu0 0.0
        %2137 = vmatprep.subr.mxu0 0.0
        %2138 = vmatpush1.msra.mxu0 0.0
        %2139 = vmatprep.subr.mxu0 0.0
        %2140 = vmatpush1.msra.mxu0 0.0
        %2141 = vmatprep.subr.mxu0 0.0
        %2142 = vmatpush1.msra.mxu0 0.0
        %2143 = vmatprep.subr.mxu0 0.0
        %2144 = vmatpush1.msra.mxu0 0.0
        %2145 = vmatprep.subr.mxu0 0.0
        %2146 = vmatpush1.msra.mxu0 0.0
        %2147 = vmatprep.subr.mxu0 0.0
        %2148 = vmatpush1.msra.mxu0 0.0
        %2149 = vmatprep.subr.mxu0 0.0
        %2150 = vmatpush1.msra.mxu0 0.0
        %2151 = vmatprep.subr.mxu0 0.0
        %2152 = vmatpush1.msra.mxu0 0.0
        %2153 = vmatprep.subr.mxu0 0.0
        %2154 = vmatpush1.msra.mxu0 0.0
        %2155 = vmatprep.subr.mxu0 0.0
        %2156 = vmatpush1.msra.mxu0 0.0
        %2157 = vmatprep.subr.mxu0 0.0
        %2158 = vmatpush1.msra.mxu0 0.0
        %2159 = vmatprep.subr.mxu0 0.0
        %2160 = vmatpush1.msra.mxu0 0.0
        %2161 = vmatprep.subr.mxu0 0.0
        %2162 = vmatpush1.msra.mxu0 0.0
        %2163 = vmatprep.subr.mxu0 0.0
        %2164 = vmatpush1.msra.mxu0 0.0
        %2165 = vmatprep.mubr.f32.mxu0 0.0
        %2166 = vmatmul.mubr.f32.gmra.mrb[0].mxu0 %v2096
        %v2167 = vpop.f32.mrb[0].mxu0
        %v2168 = vadd.f32 0.0, %v2167
        %v2169 = vpop.f32.mrb[0].mxu0
        %2170 = vmatprep.mubr.f32.mxu0 0.0
        %2171 = vmatmul.mubr.f32.gmra.mrb[0].mxu0 %v2099
        %v2172 = vpop.f32.mrb[0].mxu0
        %v2173 = vadd.f32 0.0, %v2172
        %v2174 = vpop.f32.mrb[0].mxu0
        %2175 = vdwg.mxu0
        %v2177 = vsel %vm1577, %v2010, 0
        %v2180 = vsel %vm1577, %v2011, 0
        %2182 = vmatprep.subr.mxu0 0.0
        %2183 = vmatpush1.msra.mxu0 %v1573
        %2184 = vmatprep.subr.mxu0 0.0
        %2185 = vmatpush1.msra.mxu0 %v1574
        %2186 = vmatprep.subr.mxu0 0.0
        %2187 = vmatpush1.msra.mxu0 0.0
        %2188 = vmatprep.subr.mxu0 0.0
        %2189 = vmatpush1.msra.mxu0 0.0
        %2190 = vmatprep.subr.mxu0 0.0
        %2191 = vmatpush1.msra.mxu0 0.0
        %2192 = vmatprep.subr.mxu0 0.0
        %2193 = vmatpush1.msra.mxu0 0.0
        %2194 = vmatprep.subr.mxu0 0.0
        %2195 = vmatpush1.msra.mxu0 0.0
        %2196 = vmatprep.subr.mxu0 0.0
        %2197 = vmatpush1.msra.mxu0 0.0
        %2198 = vmatprep.subr.mxu0 0.0
        %2199 = vmatpush1.msra.mxu0 0.0
        %2200 = vmatprep.subr.mxu0 0.0
        %2201 = vmatpush1.msra.mxu0 0.0
        %2202 = vmatprep.subr.mxu0 0.0
        %2203 = vmatpush1.msra.mxu0 0.0
        %2204 = vmatprep.subr.mxu0 0.0
        %2205 = vmatpush1.msra.mxu0 0.0
        %2206 = vmatprep.subr.mxu0 0.0
        %2207 = vmatpush1.msra.mxu0 0.0
        %2208 = vmatprep.subr.mxu0 0.0
        %2209 = vmatpush1.msra.mxu0 0.0
        %2210 = vmatprep.subr.mxu0 0.0
        %2211 = vmatpush1.msra.mxu0 0.0
        %2212 = vmatprep.subr.mxu0 0.0
        %2213 = vmatpush1.msra.mxu0 0.0
        %2214 = vmatprep.subr.mxu0 0.0
        %2215 = vmatpush1.msra.mxu0 0.0
        %2216 = vmatprep.subr.mxu0 0.0
        %2217 = vmatpush1.msra.mxu0 0.0
        %2218 = vmatprep.subr.mxu0 0.0
        %2219 = vmatpush1.msra.mxu0 0.0
        %2220 = vmatprep.subr.mxu0 0.0
        %2221 = vmatpush1.msra.mxu0 0.0
        %2222 = vmatprep.subr.mxu0 0.0
        %2223 = vmatpush1.msra.mxu0 0.0
        %2224 = vmatprep.subr.mxu0 0.0
        %2225 = vmatpush1.msra.mxu0 0.0
        %2226 = vmatprep.subr.mxu0 0.0
        %2227 = vmatpush1.msra.mxu0 0.0
        %2228 = vmatprep.subr.mxu0 0.0
        %2229 = vmatpush1.msra.mxu0 0.0
        %2230 = vmatprep.subr.mxu0 0.0
        %2231 = vmatpush1.msra.mxu0 0.0
        %2232 = vmatprep.subr.mxu0 0.0
        %2233 = vmatpush1.msra.mxu0 0.0
        %2234 = vmatprep.subr.mxu0 0.0
        %2235 = vmatpush1.msra.mxu0 0.0
        %2236 = vmatprep.subr.mxu0 0.0
        %2237 = vmatpush1.msra.mxu0 0.0
        %2238 = vmatprep.subr.mxu0 0.0
        %2239 = vmatpush1.msra.mxu0 0.0
        %2240 = vmatprep.subr.mxu0 0.0
        %2241 = vmatpush1.msra.mxu0 0.0
        %2242 = vmatprep.subr.mxu0 0.0
        %2243 = vmatpush1.msra.mxu0 0.0
        %2244 = vmatprep.subr.mxu0 0.0
        %2245 = vmatpush1.msra.mxu0 0.0
        %2246 = vmatprep.mubr.f32.mxu0 0.0
        %2247 = vmatmul.mubr.f32.gmra.mrb[0].mxu0 %v2177
        %v2248 = vpop.f32.mrb[0].mxu0
        %v2249 = vadd.f32 0.0, %v2248
        %v2250 = vpop.f32.mrb[0].mxu0
        %2251 = vmatprep.mubr.f32.mxu0 0.0
        %2252 = vmatmul.mubr.f32.gmra.mrb[0].mxu0 %v2180
        %v2253 = vpop.f32.mrb[0].mxu0
        %v2254 = vadd.f32 0.0, %v2253
        %v2255 = vpop.f32.mrb[0].mxu0
        %2256 = vdwg.mxu0
        %v2258 = vsel %vm1577, %v2012, 0
        %v2261 = vsel %vm1577, %v2013, 0
        %2263 = vmatprep.subr.mxu0 0.0
        %2264 = vmatpush1.msra.mxu0 %v1575
        %2265 = vmatprep.subr.mxu0 0.0
        %2266 = vmatpush1.msra.mxu0 %v1576
        %2267 = vmatprep.subr.mxu0 0.0
        %2268 = vmatpush1.msra.mxu0 0.0
        %2269 = vmatprep.subr.mxu0 0.0
        %2270 = vmatpush1.msra.mxu0 0.0
        %2271 = vmatprep.subr.mxu0 0.0
        %2272 = vmatpush1.msra.mxu0 0.0
        %2273 = vmatprep.subr.mxu0 0.0
        %2274 = vmatpush1.msra.mxu0 0.0
        %2275 = vmatprep.subr.mxu0 0.0
        %2276 = vmatpush1.msra.mxu0 0.0
        %2277 = vmatprep.subr.mxu0 0.0
        %2278 = vmatpush1.msra.mxu0 0.0
        %2279 = vmatprep.subr.mxu0 0.0
        %2280 = vmatpush1.msra.mxu0 0.0
        %2281 = vmatprep.subr.mxu0 0.0
        %2282 = vmatpush1.msra.mxu0 0.0
        %2283 = vmatprep.subr.mxu0 0.0
        %2284 = vmatpush1.msra.mxu0 0.0
        %2285 = vmatprep.subr.mxu0 0.0
        %2286 = vmatpush1.msra.mxu0 0.0
        %2287 = vmatprep.subr.mxu0 0.0
        %2288 = vmatpush1.msra.mxu0 0.0
        %2289 = vmatprep.subr.mxu0 0.0
        %2290 = vmatpush1.msra.mxu0 0.0
        %2291 = vmatprep.subr.mxu0 0.0
        %2292 = vmatpush1.msra.mxu0 0.0
        %2293 = vmatprep.subr.mxu0 0.0
        %2294 = vmatpush1.msra.mxu0 0.0
        %2295 = vmatprep.subr.mxu0 0.0
        %2296 = vmatpush1.msra.mxu0 0.0
        %2297 = vmatprep.subr.mxu0 0.0
        %2298 = vmatpush1.msra.mxu0 0.0
        %2299 = vmatprep.subr.mxu0 0.0
        %2300 = vmatpush1.msra.mxu0 0.0
        %2301 = vmatprep.subr.mxu0 0.0
        %2302 = vmatpush1.msra.mxu0 0.0
        %2303 = vmatprep.subr.mxu0 0.0
        %2304 = vmatpush1.msra.mxu0 0.0
        %2305 = vmatprep.subr.mxu0 0.0
        %2306 = vmatpush1.msra.mxu0 0.0
        %2307 = vmatprep.subr.mxu0 0.0
        %2308 = vmatpush1.msra.mxu0 0.0
        %2309 = vmatprep.subr.mxu0 0.0
        %2310 = vmatpush1.msra.mxu0 0.0
        %2311 = vmatprep.subr.mxu0 0.0
        %2312 = vmatpush1.msra.mxu0 0.0
        %2313 = vmatprep.subr.mxu0 0.0
        %2314 = vmatpush1.msra.mxu0 0.0
        %2315 = vmatprep.subr.mxu0 0.0
        %2316 = vmatpush1.msra.mxu0 0.0
        %2317 = vmatprep.subr.mxu0 0.0
        %2318 = vmatpush1.msra.mxu0 0.0
        %2319 = vmatprep.subr.mxu0 0.0
        %2320 = vmatpush1.msra.mxu0 0.0
        %2321 = vmatprep.subr.mxu0 0.0
        %2322 = vmatpush1.msra.mxu0 0.0
        %2323 = vmatprep.subr.mxu0 0.0
        %2324 = vmatpush1.msra.mxu0 0.0
        %2325 = vmatprep.subr.mxu0 0.0
        %2326 = vmatpush1.msra.mxu0 0.0
        %2327 = vmatprep.mubr.f32.mxu0 0.0
        %2328 = vmatmul.mubr.f32.gmra.mrb[0].mxu0 %v2258
        %v2329 = vpop.f32.mrb[0].mxu0
        %v2330 = vadd.f32 0.0, %v2329
        %v2331 = vpop.f32.mrb[0].mxu0
        %2332 = vmatprep.mubr.f32.mxu0 0.0
        %2333 = vmatmul.mubr.f32.gmra.mrb[0].mxu0 %v2261
        %v2334 = vpop.f32.mrb[0].mxu0
        %v2335 = vadd.f32 0.0, %v2334
        %v2336 = vpop.f32.mrb[0].mxu0
        %2337 = vdwg.mxu0
        %2338 = vst.msk [vmem:[%s339] sm:$0xff] %vm1577, %v2087
        %2339 = vst.msk [vmem:[%s339 + $0x8] sm:$0xff] %vm1577, %v2092
        %2340 = vst.msk [vmem:[%s339 + $0x10] sm:$0xff] %vm1577, %v2168
        %2341 = vst.msk [vmem:[%s339 + $0x18] sm:$0xff] %vm1577, %v2173
        %2342 = vst.msk [vmem:[%s339 + $0x20] sm:$0xff] %vm1577, %v2249
        %2343 = vst.msk [vmem:[%s339 + $0x28] sm:$0xff] %vm1577, %v2254
        %2344 = vst.msk [vmem:[%s339 + $0x30] sm:$0xff] %vm1577, %v2330
        %2345 = vst.msk [vmem:[%s339 + $0x38] sm:$0xff] %vm1577, %v2335
        %s2346 = sand.u32 %s173, 1
        %s2347 = scalar_lea.sflag [#allocation7], %s2346
        %s2348 = sand.u32 %s173, 1
        %s2349 = smul.addr %s2348, 64
        %s2350 = scalar_lea.vmem [#allocation12], %s2349
        // Predicated region
        $region57: #{tpu_custom_call.1} parent=39 // pred_check
          %p2351 = pneg %p183
        $region58: #{tpu_custom_call.1} parent=39 // pred_check_branch
          %2353 = sbr.rel (%p2351) target = $region60
        $region59: #{tpu_custom_call.1} parent=39 // pred_region
          %s2354 = smul.u32 4, %s26
          %s2356 = ssub.s32 1024, 1024
          %2357 = vsyncadd %s2347, %s2356
          %s2358 = smul.addr %s2354, 2
          %s2359 = smul.addr %s25, 8
          %s2360 = sadd.s32 %s2358, %s2359
          %s2361 = smul.addr %s2360, 128
          %s2362 = scalar_lea.hbm %s5, %s2361
          %s2363 = sshll.u32 %s2350, 4
          %s2364 = int_to_ptr.vmem [resolvable:$true] %s2363
          %2369 = dma.vmem_to_hbm [thread:$0]  %s2364, 1024, %s2362, %s2347, 128, 128, 8
        $region60: #{tpu_custom_call.1} parent=39 // pred_fallthru
          _
      $region40: #{tpu_custom_call.1} parent=5 // pred_fallthru
        _
      %p2370 = scmp.le.s32.totalorder 2, %s16
      // Predicated region
      $region61: #{tpu_custom_call.1} parent=5 // pred_check
        %p2371 = pneg %p2370
      $region62: #{tpu_custom_call.1} parent=5 // pred_check_branch
        %2373 = sbr.rel (%p2371) target = $region64
      $region63: #{tpu_custom_call.1} parent=5 // pred_region
        %s2374 = ssub.s32 %s16, 2
        // Predicated region
        $region65: #{tpu_custom_call.1} parent=63 // pred_check
          %p2375 = pneg %p189
        $region66: #{tpu_custom_call.1} parent=63 // pred_check_branch
          %2377 = sbr.rel (%p2375) target = $region68
        $region67: #{tpu_custom_call.1} parent=63 // pred_region
          %s2378 = sand.u32 %s174, 1
          %s2379 = scalar_lea.sflag [#allocation7], %s2378
          %s2380 = sand.u32 %s174, 1
          %s2381 = smul.addr %s2380, 64
          %s2382 = scalar_lea.vmem [#allocation12], %s2381
          %2383 = dma.done %s2379, 1024
        $region68: #{tpu_custom_call.1} parent=63 // pred_fallthru
          _
      $region64: #{tpu_custom_call.1} parent=5 // pred_fallthru
        _
    $region6: #{tpu_custom_call.1} parent=1 // loop_footer
      %s20 = sadd.s32 1, %s16
    $region7: #{tpu_custom_call.1} parent=1 // loop_footer_branch
      %15 = sbr.rel target = $region3
    $region8: #{tpu_custom_call.1} parent=1 // loop_exit
      _
    %2384 = vsyncpa [#allocation6], 1
    %s2385 = scalar_lea.sflag [#allocation6], 1
    %2386 = vsyncpa %s2385, 1
    %2387 = vsyncpa [#allocation9], 1
    %2388 = vsyncpa [#allocation7], 1
    %s2389 = scalar_lea.sflag [#allocation7], 1
    %2390 = vsyncpa %s2389, 1

</llo_original>
